<compile_context>
chip_gen: v7x
topology: tpu7x:2x2x1
jax: 0.10.0
libtpu: 0.0.40
codegen_flags: <defaults>
</compile_context>

<pallas_src>
import functools

import jax
import jax.numpy as jnp
import numpy as np
from jax.experimental import pallas as pl
from jax.experimental.pallas import tpu as pltpu

# braindecode ShallowFBCSPNet defaults (final_conv_length='auto')
N_FILTERS_TIME = 40
FILTER_TIME_LENGTH = 25
N_FILTERS_SPAT = 40
POOL_TIME_LENGTH = 75
POOL_TIME_STRIDE = 15
BN_EPS = 1e-5
SAFE_LOG_EPS = 1e-6
CONV_TAP_CHUNK = 5            # 25 taps -> 5 chunks of 5 taps (k-chunked im2col)


def _round_up(x, m):
    return ((x + m - 1) // m) * m


def _shallow_fbcsp_kernel(x_ref, wf_ref, bf_ref, pool_ref, wc_ref, bc_ref, out_ref):
    """One grid step == tb batch elements, processed one element at a time.

    x_ref    : (tb, Cp, Tp)          input block (Cp multiple of 8, Tp multiple of 128), bf16/f32
    wf_ref   : (n_chunks, G, CK*Cp)  folded conv_time+conv_spat+BN weight, chunked over taps
    bf_ref   : (G, 1)                folded bias (f32)
    pool_ref : (Lp, Pt)              per-element average-pool matrix (f32, 1/75 entries)
    wc_ref   : (n_cls, G, Pt)        classifier weight (f32, zero-padded over pooled time)
    bc_ref   : (n_cls, 1)            classifier bias (f32)
    out_ref  : (1, n_cls, tb)        log-probabilities (classes on sublanes, batch on lanes)
    """
    tb = x_ref.shape[0]
    cp = x_ref.shape[1]
    n_chunks = wf_ref.shape[0]
    ck = wf_ref.shape[2] // cp
    lp_w = pool_ref.shape[0]          # Lp: conv-output width handled per element

    # Hoist grid-invariant operands out of the per-element loop (no per-iter broadcasts/loads).
    w_chunks = [wf_ref[c] for c in range(n_chunks)]     # each (G, CK*Cp)
    b_fold = bf_ref[...]                                # (G, 1)  f32
    pool_m = pool_ref[...]                              # (Lp, Pt) f32
    wc = wc_ref[...]                                    # (n_cls, G, Pt) f32

    cols = []
    for b in range(tb):                                 # tb is small & static -> unrolled
        xb = x_ref[b]                                   # (Cp, Tp)

        # conv_time -> conv_spat -> BatchNorm(eval), all folded into one affine map.
        # K-chunked im2col: slab construction of chunk c+1 overlaps MXU work of chunk c,
        # and the full (K*Cp, Lp) im2col temporary is never materialized.
        acc = None
        for c in range(n_chunks):
            slab = jnp.concatenate(
                [xb[:, k:k + lp_w] for k in range(c * ck, (c + 1) * ck)], axis=0)
            part = jnp.dot(w_chunks[c], slab, preferred_element_type=jnp.float32)
            acc = part if acc is None else acc + part
        y = acc + b_fold                                # (G, Lp) f32

        # square -> AvgPool((75,1),(15,1)) -> safe_log (all f32).
        y = y * y
        pooled = jnp.dot(y, pool_m, preferred_element_type=jnp.float32)   # (G, Pt)
        logp = jnp.log(jnp.maximum(pooled, SAFE_LOG_EPS))
        # TODO(synk): training-mode dropout / batch-statistics BatchNorm not implemented
        # (eval-mode semantics only; Dropout is identity in eval).

        # conv_classifier: tiny (n_cls, G, t_pool) contraction -> VPU multiply + lane reduces
        # (no per-p lane-shuffle concats; padded p-columns have zero classifier weight).
        prod = wc * logp[None, :, :]                    # (n_cls, G, Pt)
        col = jnp.sum(jnp.sum(prod, axis=2), axis=1, keepdims=True)       # (n_cls, 1)
        cols.append(col)

    logits = jnp.concatenate(cols, axis=1) + bc_ref[...]                  # (n_cls, tb)

    # LogSoftmax over classes (sublane axis); batch stays on lanes.
    m = jnp.max(logits, axis=0, keepdims=True)
    z = logits - m
    lse = jnp.log(jnp.sum(jnp.exp(z), axis=0, keepdims=True))
    out_ref[0] = (z - lse).astype(out_ref.dtype)


def _pool_matrix(Lp, t_pool, Pt):
    """Per-element AvgPool matrix: (Lp, Pt), column p averages conv columns [p*15, p*15+75)."""
    P = np.zeros((Lp, Pt), dtype=np.float32)
    for p in range(t_pool):
        s = p * POOL_TIME_STRIDE
        P[s:s + POOL_TIME_LENGTH, p] = 1.0 / POOL_TIME_LENGTH
    return jnp.asarray(P)


@functools.partial(jax.jit, static_argnames=("block_batch", "matmul_dtype"))
def shallow_fbcsp_encoder_forward(x, params, *, block_batch=None, matmul_dtype=jnp.bfloat16):
    """x: (B, C, T) float32.  Returns (B, n_classes) log-probabilities (eval mode).

    matmul_dtype is the conv-matmul operand dtype (accumulation is always f32).  The default
    bf16 gives full-rate MXU on v6e/v7x and halves im2col bytes; pass jnp.float32 for
    bit-tight agreement with the f32 reference.
    """
    B, C, T = x.shape
    K = FILTER_TIME_LENGTH
    F, G = N_FILTERS_TIME, N_FILTERS_SPAT
    T1 = T - K + 1
    if T1 < POOL_TIME_LENGTH:
        raise ValueError("input_window_samples too small for ShallowFBCSPNet")
    t_pool = (T1 - POOL_TIME_LENGTH) // POOL_TIME_STRIDE + 1
    n_classes = params['bc'].shape[0]

    # ---- lane/sublane-aligned padded sizes ----
    Cp = _round_up(C, 8)              # channels -> sublane multiple
    Lp = _round_up(T1, 128)           # conv-output / im2col width -> lane multiple
    Tp = Lp + 128                     # input width (k + Lp <= Tp for every tap k < 25), lane mult.
    Pt = _round_up(t_pool, 128)       # pooled width -> lane multiple

    # ---- batch blocking: tb elements per grid step; keep >= 4 grid steps when possible so both
    #      v7x TensorCores get >= 2 pipelined iterations each ----
    if block_batch is None:
        block_batch = max(1, min(16, B // 4))
    tb = int(block_batch)
    Bp = _round_up(B, tb)
    nblk = Bp // tb

    # ---- input: one fused pad+cast pass, NO transpose (review: minimize wrapper HBM traffic) ----
    xg = jnp.pad(x, ((0, Bp - B), (0, Cp - C), (0, Tp - T))).astype(matmul_dtype)

    # ---- fold conv_time -> conv_spat -> BatchNorm(eval) into one affine map, chunked over taps ----
    ws = params['ws'][:, :, 0, :]                                         # (G, F, C)
    if Cp != C:
        ws = jnp.pad(ws, ((0, 0), (0, 0), (0, Cp - C)))
    scale = params['gamma'] * jax.lax.rsqrt(params['rvar'] + BN_EPS)      # (G,)
    shift = params['beta'] - params['rmean'] * scale                      # (G,)
    w_eff = jnp.einsum('gfc,fk->gkc', ws, params['wt']) * scale[:, None, None]   # (G, K, Cp)
    ck = CONV_TAP_CHUNK
    n_chunks = K // ck                                                    # 25 / 5 = 5
    wf_chunks = (w_eff.reshape(G, n_chunks, ck, Cp).transpose(1, 0, 2, 3)
                 .reshape(n_chunks, G, ck * Cp).astype(matmul_dtype))
    b_fold = (scale * jnp.einsum('gfc,f->g', ws, params['bt']) + shift).reshape(G, 1)

    pool_mat = _pool_matrix(Lp, t_pool, Pt)                               # (Lp, Pt) f32
    wc3 = jnp.pad(params['wc'][:, :, :, 0], ((0, 0), (0, 0), (0, Pt - t_pool)))  # (n, G, Pt)
    bc_col = params['bc'].reshape(n_classes, 1)

    grid_spec = pltpu.PrefetchScalarGridSpec(
        num_scalar_prefetch=0,
        grid=(nblk,),
        in_specs=[
            pl.BlockSpec((tb, Cp, Tp), lambda i: (i, 0, 0)),
            # Grid-invariant operands below total < 1 MiB, so default double-buffering is fine
            # even within v7x's 64 MiB VMEM.
            pl.BlockSpec((n_chunks, G, ck * Cp), lambda i: (0, 0, 0)),
            pl.BlockSpec((G, 1), lambda i: (0, 0)),
            pl.BlockSpec((Lp, Pt), lambda i: (0, 0)),
            pl.BlockSpec((n_classes, G, Pt), lambda i: (0, 0, 0)),
            pl.BlockSpec((n_classes, 1), lambda i: (0, 0)),
        ],
        out_specs=pl.BlockSpec((1, n_classes, tb), lambda i: (i, 0, 0)),
    )

    itemsize = jnp.dtype(matmul_dtype).itemsize
    cost = pl.CostEstimate(
        flops=int(Bp * (2 * G * K * Cp * Lp + G * Lp + 2 * G * Lp * Pt
                        + 3 * n_classes * G * Pt)),
        transcendentals=int(Bp * (G * Pt + n_classes)),
        bytes_accessed=int(Bp * Cp * Tp * itemsize + Bp * n_classes * 4
                           + pool_mat.size * 4 + wc3.size * 4 + wf_chunks.size * itemsize),
    )

    out = pl.pallas_call(
        _shallow_fbcsp_kernel,
        out_shape=jax.ShapeDtypeStruct((nblk, n_classes, tb), jnp.float32),
        grid_spec=grid_spec,
        compiler_params=pltpu.CompilerParams(
            dimension_semantics=("parallel",),
            vmem_limit_bytes=48 * 1024 * 1024,     # explicit budget, < v7x 64 MiB physical
        ),
        cost_estimate=cost,
    )(xg, wf_chunks, b_fold, pool_mat, wc3, bc_col)

    # (nblk, n_classes, tb) -> (B, n_classes)
    return out.transpose(0, 2, 1).reshape(Bp, n_classes)[:B]


def make_params(key, n_chans, n_times, n_classes):
    """Deterministic synthetic parameters in PyTorch-native layouts."""
    T1 = n_times - FILTER_TIME_LENGTH + 1
    t_pool = (T1 - POOL_TIME_LENGTH) // POOL_TIME_STRIDE + 1   # final_conv_length='auto'
    ks = jax.random.split(key, 9)
    f32 = jnp.float32
    F, G = N_FILTERS_TIME, N_FILTERS_SPAT
    wt = 0.1 * jax.random.normal(ks[0], (F, FILTER_TIME_LENGTH), f32)       # conv_time (F,1,25,1)
    bt = 0.1 * jax.random.normal(ks[1], (F,), f32)
    ws = 0.1 * jax.random.normal(ks[2], (G, F, 1, n_chans), f32)            # conv_spat, no bias
    gamma = 1.0 + 0.1 * jax.random.normal(ks[3], (G,), f32)
    beta = 0.1 * jax.random.normal(ks[4], (G,), f32)
    rmean = 0.1 * jax.random.normal(ks[5], (G,), f32)
    rvar = 1.0 + 0.1 * jnp.abs(jax.random.normal(ks[6], (G,), f32))
    wc = 0.1 * jax.random.normal(ks[7], (n_classes, G, t_pool, 1), f32)     # conv_classifier
    bc = 0.1 * jax.random.normal(ks[8], (n_classes,), f32)
    return dict(wt=wt, bt=bt, ws=ws, gamma=gamma, beta=beta,
                rmean=rmean, rvar=rvar, wc=wc, bc=bc)


def reference_forward(x, params):
    """Plain-JAX (XLA) f32 reference of the same eval-mode forward pass."""
    B, C, T = x.shape
    K = FILTER_TIME_LENGTH
    T1 = T - K + 1
    xcols = jnp.stack([x[:, :, k:k + T1] for k in range(K)], axis=2)        # (B, C, K, T1)
    h = jnp.einsum('fk,bckt->bfct', params['wt'], xcols) + params['bt'][None, :, None, None]
    y = jnp.einsum('gfc,bfct->bgt', params['ws'][:, :, 0, :], h)            # (B, G, T1)
    scale = params['gamma'] / jnp.sqrt(params['rvar'] + BN_EPS)
    y = (y - params['rmean'][None, :, None]) * scale[None, :, None] + params['beta'][None, :, None]
    y = y * y
    t_pool = (T1 - POOL_TIME_LENGTH) // POOL_TIME_STRIDE + 1
    pooled = jnp.stack(
        [jnp.mean(y[:, :, p * POOL_TIME_STRIDE:p * POOL_TIME_STRIDE + POOL_TIME_LENGTH], axis=2)
         for p in range(t_pool)], axis=2)                                   # (B, G, t_pool)
    pooled = jnp.log(jnp.maximum(pooled, SAFE_LOG_EPS))
    logits = jnp.einsum('bgp,ngp->bn', pooled, params['wc'][:, :, :, 0]) + params['bc'][None, :]
    return jax.nn.log_softmax(logits, axis=-1)


if __name__ == "__main__":
    key = jax.random.PRNGKey(0)
    # sample_shape = (n_chans, input_window_samples); T chosen so 'auto' final conv length works
    B, C, T = 2, 4, 114
    n_classes = 5
    kx, kp = jax.random.split(key)
    x = jax.random.normal(kx, (B, C, T), jnp.float32)
    params = make_params(kp, C, T, n_classes)

    ref = jax.block_until_ready(reference_forward(x, params))

    # exact-path check (f32 matmul operands)
    out_f32 = jax.block_until_ready(
        shallow_fbcsp_encoder_forward(x, params, matmul_dtype=jnp.float32))
    assert out_f32.shape == (B, n_classes)
    err = float(jnp.max(jnp.abs(out_f32 - ref)))
    assert err < 1e-3, f"f32 mismatch vs reference: {err}"

    # default fast path (bf16 matmul operands, f32 accumulation) -> looser tolerance
    out_bf16 = jax.block_until_ready(shallow_fbcsp_encoder_forward(x, params))
    errb = float(jnp.max(jnp.abs(out_bf16 - ref)))
    assert errb < 5e-2, f"bf16 mismatch vs reference: {errb}"

    # batched path: B=16 -> tb=4 elements per grid step, 4 grid steps
    xb = jax.random.normal(jax.random.PRNGKey(1), (16, C, T), jnp.float32)
    refb = jax.block_until_ready(reference_forward(xb, params))
    outb = jax.block_until_ready(
        shallow_fbcsp_encoder_forward(xb, params, matmul_dtype=jnp.float32))
    errbb = float(jnp.max(jnp.abs(outb - refb)))
    assert errbb < 1e-3, f"mismatch vs reference (batched): {errbb}"

    print("KERNEL_OK")
</pallas_src>

<mosaic_0001>
module attributes {stable_mosaic.version = 11 : i64} {
  func.func @_shallow_fbcsp_kernel(%arg0: i32, %arg1: memref<1x8x256xf32, #tpu.memory_space<vmem>>, %arg2: memref<5x40x40xf32, #tpu.memory_space<vmem>>, %arg3: memref<40x1xf32, #tpu.memory_space<vmem>>, %arg4: memref<128x128xf32, #tpu.memory_space<vmem>>, %arg5: memref<5x40x128xf32, #tpu.memory_space<vmem>>, %arg6: memref<5x1xf32, #tpu.memory_space<vmem>>, %arg7: memref<1x5x1xf32, #tpu.memory_space<vmem>>) attributes {dimension_semantics = [#tpu.dimension_semantics<parallel>], iteration_bounds = array<i64: 2>, scalar_prefetch = 0 : i64, scratch_operands = 0 : i64, tpu.core_type = #tpu.core_type<tc>, window_params = [{transform_indices = @transform_0, window_bounds = array<i64: 1, 8, 256>}, {pipeline_mode = #tpu.pipeline_mode<synchronous>, transform_indices = @transform_1, window_bounds = array<i64: 5, 40, 40>}, {pipeline_mode = #tpu.pipeline_mode<synchronous>, transform_indices = @transform_2, window_bounds = array<i64: 40, 1>}, {pipeline_mode = #tpu.pipeline_mode<synchronous>, transform_indices = @transform_3, window_bounds = array<i64: 128, 128>}, {pipeline_mode = #tpu.pipeline_mode<synchronous>, transform_indices = @transform_4, window_bounds = array<i64: 5, 40, 128>}, {pipeline_mode = #tpu.pipeline_mode<synchronous>, transform_indices = @transform_5, window_bounds = array<i64: 5, 1>}, {transform_indices = @transform_6, window_bounds = array<i64: 1, 5, 1>}]} {
    %c0 = arith.constant 0 : index
    %c0_0 = arith.constant 0 : index
    %c0_1 = arith.constant 0 : index
    %0 = vector.load %arg2[%c0, %c0_0, %c0_1] : memref<5x40x40xf32, #tpu.memory_space<vmem>>, vector<1x40x40xf32>
    %1 = vector.shape_cast %0 : vector<1x40x40xf32> to vector<40x40xf32>
    %c1 = arith.constant 1 : index
    %c0_2 = arith.constant 0 : index
    %c0_3 = arith.constant 0 : index
    %2 = vector.load %arg2[%c1, %c0_2, %c0_3] : memref<5x40x40xf32, #tpu.memory_space<vmem>>, vector<1x40x40xf32>
    %3 = vector.shape_cast %2 : vector<1x40x40xf32> to vector<40x40xf32>
    %c2 = arith.constant 2 : index
    %c0_4 = arith.constant 0 : index
    %c0_5 = arith.constant 0 : index
    %4 = vector.load %arg2[%c2, %c0_4, %c0_5] : memref<5x40x40xf32, #tpu.memory_space<vmem>>, vector<1x40x40xf32>
    %5 = vector.shape_cast %4 : vector<1x40x40xf32> to vector<40x40xf32>
    %c3 = arith.constant 3 : index
    %c0_6 = arith.constant 0 : index
    %c0_7 = arith.constant 0 : index
    %6 = vector.load %arg2[%c3, %c0_6, %c0_7] : memref<5x40x40xf32, #tpu.memory_space<vmem>>, vector<1x40x40xf32>
    %7 = vector.shape_cast %6 : vector<1x40x40xf32> to vector<40x40xf32>
    %c4 = arith.constant 4 : index
    %c0_8 = arith.constant 0 : index
    %c0_9 = arith.constant 0 : index
    %8 = vector.load %arg2[%c4, %c0_8, %c0_9] : memref<5x40x40xf32, #tpu.memory_space<vmem>>, vector<1x40x40xf32>
    %9 = vector.shape_cast %8 : vector<1x40x40xf32> to vector<40x40xf32>
    %c0_10 = arith.constant 0 : index
    %c0_11 = arith.constant 0 : index
    %10 = vector.load %arg3[%c0_10, %c0_11] : memref<40x1xf32, #tpu.memory_space<vmem>>, vector<40x1xf32>
    %c0_12 = arith.constant 0 : index
    %c0_13 = arith.constant 0 : index
    %11 = vector.load %arg4[%c0_12, %c0_13] : memref<128x128xf32, #tpu.memory_space<vmem>>, vector<128x128xf32>
    %c0_14 = arith.constant 0 : index
    %c0_15 = arith.constant 0 : index
    %c0_16 = arith.constant 0 : index
    %12 = vector.load %arg5[%c0_14, %c0_15, %c0_16] : memref<5x40x128xf32, #tpu.memory_space<vmem>>, vector<5x40x128xf32>
    %c0_17 = arith.constant 0 : index
    %c0_18 = arith.constant 0 : index
    %c0_19 = arith.constant 0 : index
    %13 = vector.load %arg1[%c0_17, %c0_18, %c0_19] : memref<1x8x256xf32, #tpu.memory_space<vmem>>, vector<1x8x256xf32>
    %14 = vector.shape_cast %13 : vector<1x8x256xf32> to vector<8x256xf32>
    %15 = vector.extract_strided_slice %14 {offsets = [0, 0], sizes = [8, 128], strides = [1, 1]} : vector<8x256xf32> to vector<8x128xf32>
    %16 = vector.extract_strided_slice %14 {offsets = [0, 1], sizes = [8, 128], strides = [1, 1]} : vector<8x256xf32> to vector<8x128xf32>
    %17 = vector.extract_strided_slice %14 {offsets = [0, 2], sizes = [8, 128], strides = [1, 1]} : vector<8x256xf32> to vector<8x128xf32>
    %18 = vector.extract_strided_slice %14 {offsets = [0, 3], sizes = [8, 128], strides = [1, 1]} : vector<8x256xf32> to vector<8x128xf32>
    %19 = vector.extract_strided_slice %14 {offsets = [0, 4], sizes = [8, 128], strides = [1, 1]} : vector<8x256xf32> to vector<8x128xf32>
    %20 = tpu.concatenate %15, %16, %17, %18, %19 in 0 : vector<8x128xf32>, vector<8x128xf32>, vector<8x128xf32>, vector<8x128xf32>, vector<8x128xf32> -> vector<40x128xf32>
    %cst = arith.constant dense<0.000000e+00> : vector<40x128xf32>
    %21 = tpu.matmul %1, %20, %cst {dimension_numbers = #tpu.dot_dimension_numbers<[1], [0], [0], [1], [0, 0, 1, 1], [], []>} : vector<40x40xf32>, vector<40x128xf32>, vector<40x128xf32> -> vector<40x128xf32>
    %22 = vector.extract_strided_slice %14 {offsets = [0, 5], sizes = [8, 128], strides = [1, 1]} : vector<8x256xf32> to vector<8x128xf32>
    %23 = vector.extract_strided_slice %14 {offsets = [0, 6], sizes = [8, 128], strides = [1, 1]} : vector<8x256xf32> to vector<8x128xf32>
    %24 = vector.extract_strided_slice %14 {offsets = [0, 7], sizes = [8, 128], strides = [1, 1]} : vector<8x256xf32> to vector<8x128xf32>
    %25 = vector.extract_strided_slice %14 {offsets = [0, 8], sizes = [8, 128], strides = [1, 1]} : vector<8x256xf32> to vector<8x128xf32>
    %26 = vector.extract_strided_slice %14 {offsets = [0, 9], sizes = [8, 128], strides = [1, 1]} : vector<8x256xf32> to vector<8x128xf32>
    %27 = tpu.concatenate %22, %23, %24, %25, %26 in 0 : vector<8x128xf32>, vector<8x128xf32>, vector<8x128xf32>, vector<8x128xf32>, vector<8x128xf32> -> vector<40x128xf32>
    %cst_20 = arith.constant dense<0.000000e+00> : vector<40x128xf32>
    %28 = tpu.matmul %3, %27, %cst_20 {dimension_numbers = #tpu.dot_dimension_numbers<[1], [0], [0], [1], [0, 0, 1, 1], [], []>} : vector<40x40xf32>, vector<40x128xf32>, vector<40x128xf32> -> vector<40x128xf32>
    %29 = arith.addf %21, %28 : vector<40x128xf32>
    %30 = vector.extract_strided_slice %14 {offsets = [0, 10], sizes = [8, 128], strides = [1, 1]} : vector<8x256xf32> to vector<8x128xf32>
    %31 = vector.extract_strided_slice %14 {offsets = [0, 11], sizes = [8, 128], strides = [1, 1]} : vector<8x256xf32> to vector<8x128xf32>
    %32 = vector.extract_strided_slice %14 {offsets = [0, 12], sizes = [8, 128], strides = [1, 1]} : vector<8x256xf32> to vector<8x128xf32>
    %33 = vector.extract_strided_slice %14 {offsets = [0, 13], sizes = [8, 128], strides = [1, 1]} : vector<8x256xf32> to vector<8x128xf32>
    %34 = vector.extract_strided_slice %14 {offsets = [0, 14], sizes = [8, 128], strides = [1, 1]} : vector<8x256xf32> to vector<8x128xf32>
    %35 = tpu.concatenate %30, %31, %32, %33, %34 in 0 : vector<8x128xf32>, vector<8x128xf32>, vector<8x128xf32>, vector<8x128xf32>, vector<8x128xf32> -> vector<40x128xf32>
    %cst_21 = arith.constant dense<0.000000e+00> : vector<40x128xf32>
    %36 = tpu.matmul %5, %35, %cst_21 {dimension_numbers = #tpu.dot_dimension_numbers<[1], [0], [0], [1], [0, 0, 1, 1], [], []>} : vector<40x40xf32>, vector<40x128xf32>, vector<40x128xf32> -> vector<40x128xf32>
    %37 = arith.addf %29, %36 : vector<40x128xf32>
    %38 = vector.extract_strided_slice %14 {offsets = [0, 15], sizes = [8, 128], strides = [1, 1]} : vector<8x256xf32> to vector<8x128xf32>
    %39 = vector.extract_strided_slice %14 {offsets = [0, 16], sizes = [8, 128], strides = [1, 1]} : vector<8x256xf32> to vector<8x128xf32>
    %40 = vector.extract_strided_slice %14 {offsets = [0, 17], sizes = [8, 128], strides = [1, 1]} : vector<8x256xf32> to vector<8x128xf32>
    %41 = vector.extract_strided_slice %14 {offsets = [0, 18], sizes = [8, 128], strides = [1, 1]} : vector<8x256xf32> to vector<8x128xf32>
    %42 = vector.extract_strided_slice %14 {offsets = [0, 19], sizes = [8, 128], strides = [1, 1]} : vector<8x256xf32> to vector<8x128xf32>
    %43 = tpu.concatenate %38, %39, %40, %41, %42 in 0 : vector<8x128xf32>, vector<8x128xf32>, vector<8x128xf32>, vector<8x128xf32>, vector<8x128xf32> -> vector<40x128xf32>
    %cst_22 = arith.constant dense<0.000000e+00> : vector<40x128xf32>
    %44 = tpu.matmul %7, %43, %cst_22 {dimension_numbers = #tpu.dot_dimension_numbers<[1], [0], [0], [1], [0, 0, 1, 1], [], []>} : vector<40x40xf32>, vector<40x128xf32>, vector<40x128xf32> -> vector<40x128xf32>
    %45 = arith.addf %37, %44 : vector<40x128xf32>
    %46 = vector.extract_strided_slice %14 {offsets = [0, 20], sizes = [8, 128], strides = [1, 1]} : vector<8x256xf32> to vector<8x128xf32>
    %47 = vector.extract_strided_slice %14 {offsets = [0, 21], sizes = [8, 128], strides = [1, 1]} : vector<8x256xf32> to vector<8x128xf32>
    %48 = vector.extract_strided_slice %14 {offsets = [0, 22], sizes = [8, 128], strides = [1, 1]} : vector<8x256xf32> to vector<8x128xf32>
    %49 = vector.extract_strided_slice %14 {offsets = [0, 23], sizes = [8, 128], strides = [1, 1]} : vector<8x256xf32> to vector<8x128xf32>
    %50 = vector.extract_strided_slice %14 {offsets = [0, 24], sizes = [8, 128], strides = [1, 1]} : vector<8x256xf32> to vector<8x128xf32>
    %51 = tpu.concatenate %46, %47, %48, %49, %50 in 0 : vector<8x128xf32>, vector<8x128xf32>, vector<8x128xf32>, vector<8x128xf32>, vector<8x128xf32> -> vector<40x128xf32>
    %cst_23 = arith.constant dense<0.000000e+00> : vector<40x128xf32>
    %52 = tpu.matmul %9, %51, %cst_23 {dimension_numbers = #tpu.dot_dimension_numbers<[1], [0], [0], [1], [0, 0, 1, 1], [], []>} : vector<40x40xf32>, vector<40x128xf32>, vector<40x128xf32> -> vector<40x128xf32>
    %53 = arith.addf %45, %52 : vector<40x128xf32>
    %54 = vector.broadcast %10 : vector<40x1xf32> to vector<40x128xf32>
    %55 = arith.addf %53, %54 : vector<40x128xf32>
    %56 = arith.mulf %55, %55 : vector<40x128xf32>
    %cst_24 = arith.constant dense<0.000000e+00> : vector<40x128xf32>
    %57 = tpu.matmul %56, %11, %cst_24 {dimension_numbers = #tpu.dot_dimension_numbers<[1], [0], [0], [1], [0, 0, 1, 1], [], []>} : vector<40x128xf32>, vector<128x128xf32>, vector<40x128xf32> -> vector<40x128xf32>
    %cst_25 = arith.constant 9.99999997E-7 : f32
    %58 = vector.broadcast %cst_25 : f32 to vector<40x128xf32>
    %59 = arith.maximumf %57, %58 : vector<40x128xf32>
    %60 = math.log %59 : vector<40x128xf32>
    %61 = vector.shape_cast %60 : vector<40x128xf32> to vector<1x40x128xf32>
    %62 = vector.broadcast %61 : vector<1x40x128xf32> to vector<5x40x128xf32>
    %63 = arith.mulf %12, %62 : vector<5x40x128xf32>
    %cst_26 = arith.constant dense<0.000000e+00> : vector<5x40xf32>
    %64 = vector.multi_reduction <add>, %63, %cst_26 [2] : vector<5x40x128xf32> to vector<5x40xf32>
    %cst_27 = arith.constant dense<0.000000e+00> : vector<5xf32>
    %65 = vector.multi_reduction <add>, %64, %cst_27 [1] : vector<5x40xf32> to vector<5xf32>
    %66 = vector.shape_cast %65 : vector<5xf32> to vector<5x1xf32>
    %c0_28 = arith.constant 0 : index
    %c0_29 = arith.constant 0 : index
    %67 = vector.load %arg6[%c0_28, %c0_29] : memref<5x1xf32, #tpu.memory_space<vmem>>, vector<5x1xf32>
    %68 = arith.addf %66, %67 : vector<5x1xf32>
    %cst_30 = arith.constant dense<0xFF800000> : vector<1xf32>
    %69 = vector.multi_reduction <maximumf>, %68, %cst_30 [0] : vector<5x1xf32> to vector<1xf32>
    %70 = vector.shape_cast %69 : vector<1xf32> to vector<1x1xf32>
    %71 = vector.broadcast %70 : vector<1x1xf32> to vector<5x1xf32>
    %72 = arith.subf %68, %71 : vector<5x1xf32>
    %73 = math.exp %72 : vector<5x1xf32>
    %cst_31 = arith.constant dense<0.000000e+00> : vector<1xf32>
    %74 = vector.multi_reduction <add>, %73, %cst_31 [0] : vector<5x1xf32> to vector<1xf32>
    %75 = vector.shape_cast %74 : vector<1xf32> to vector<1x1xf32>
    %76 = math.log %75 : vector<1x1xf32>
    %77 = vector.broadcast %76 : vector<1x1xf32> to vector<5x1xf32>
    %78 = arith.subf %72, %77 : vector<5x1xf32>
    %c0_32 = arith.constant 0 : index
    %c0_33 = arith.constant 0 : index
    %c0_34 = arith.constant 0 : index
    %79 = vector.load %arg7[%c0_32, %c0_33, %c0_34] : memref<1x5x1xf32, #tpu.memory_space<vmem>>, vector<1x5x1xf32>
    %80 = vector.shape_cast %79 : vector<1x5x1xf32> to vector<5x1xf32>
    %81 = vector.shape_cast %78 : vector<5x1xf32> to vector<1x5x1xf32>
    tpu.vector_store %arg7[%c0_32, %c0_33, %c0_34], %81 {strides = array<i32>} : memref<1x5x1xf32, #tpu.memory_space<vmem>>, vector<1x5x1xf32>,
    return
  }
  func.func @transform_0(%arg0: i32) -> (i32, i32, i32) {
    %c0_i32 = arith.constant 0 : i32
    %c0_i32_0 = arith.constant 0 : i32
    %c0_i32_1 = arith.constant 0 : i32
    return %arg0, %c0_i32, %c0_i32_0 : i32, i32, i32
  }
  func.func @transform_1(%arg0: i32) -> (i32, i32, i32) {
    %c0_i32 = arith.constant 0 : i32
    %c0_i32_0 = arith.constant 0 : i32
    %c0_i32_1 = arith.constant 0 : i32
    %c0_i32_2 = arith.constant 0 : i32
    return %c0_i32, %c0_i32_0, %c0_i32_1 : i32, i32, i32
  }
  func.func @transform_2(%arg0: i32) -> (i32, i32) {
    %c0_i32 = arith.constant 0 : i32
    %c0_i32_0 = arith.constant 0 : i32
    %c0_i32_1 = arith.constant 0 : i32
    return %c0_i32, %c0_i32_0 : i32, i32
  }
  func.func @transform_3(%arg0: i32) -> (i32, i32) {
    %c0_i32 = arith.constant 0 : i32
    %c0_i32_0 = arith.constant 0 : i32
    %c0_i32_1 = arith.constant 0 : i32
    return %c0_i32, %c0_i32_0 : i32, i32
  }
  func.func @transform_4(%arg0: i32) -> (i32, i32, i32) {
    %c0_i32 = arith.constant 0 : i32
    %c0_i32_0 = arith.constant 0 : i32
    %c0_i32_1 = arith.constant 0 : i32
    %c0_i32_2 = arith.constant 0 : i32
    return %c0_i32, %c0_i32_0, %c0_i32_1 : i32, i32, i32
  }
  func.func @transform_5(%arg0: i32) -> (i32, i32) {
    %c0_i32 = arith.constant 0 : i32
    %c0_i32_0 = arith.constant 0 : i32
    %c0_i32_1 = arith.constant 0 : i32
    return %c0_i32, %c0_i32_0 : i32, i32
  }
  func.func @transform_6(%arg0: i32) -> (i32, i32, i32) {
    %c0_i32 = arith.constant 0 : i32
    %c0_i32_0 = arith.constant 0 : i32
    %c0_i32_1 = arith.constant 0 : i32
    return %arg0, %c0_i32, %c0_i32_0 : i32, i32, i32
  }
}

</mosaic_0001>

<llo_original>
// kernel: shallow_fbcsp_encoder_forward.1
$region0: #{shallow_fbcsp_encoder_forward.1}
  #allocation0 [shape = 'u32[]', space=smem, size = 0x4, offset = 0x4, fixed_abs, tag = 'smem constant byte address 0x4 - core index']
  #allocation1 [shape = 'u32[144,128]{1,0:T(1,128)}', space=vmem, size = 0x12000, scoped, tag = 'internal scratch']
  %s0 = inlined_call_operand.vmem [shape: f32[2,8,256], index: 0, kind: input, shape index: {}]
  %s1 = inlined_call_operand.vmem [shape: f32[5,40,40], index: 1, kind: input, shape index: {}]
  %s2 = inlined_call_operand.vmem [shape: f32[40,1], index: 2, kind: input, shape index: {}]
  %s3 = inlined_call_operand.vmem [shape: f32[128,128], index: 3, kind: input, shape index: {}]
  %s4 = inlined_call_operand.vmem [shape: f32[5,40,128], index: 4, kind: input, shape index: {}]
  %s5 = inlined_call_operand.vmem [shape: f32[5,1], index: 5, kind: input, shape index: {}]
  %s6 = inlined_call_operand.vmem [shape: f32[2,5,1], index: 6, kind: output, shape index: {}]
  %s7 = sld [smem:[#allocation0]]
  $region57: #{shallow_fbcsp_encoder_forward.1} parent=0
    _
  %s9 = ssub.s32 1, %s7
  %s10 = scalar_select 0, %s9, %s7
  loop: start=0, step=1, limit=4
  $region2: #{shallow_fbcsp_encoder_forward.1} parent=0 // loop_pre_header
    _
  $region3: #{shallow_fbcsp_encoder_forward.1} parent=0 // loop_header
    %s12 = sphi 0, %s16
    %p13 = scmp.ge.s32.totalorder %s12, 4
    %s22 = sphi 0, %s24
    %s25 = sphi 0, %s22
    %s26 = sphi 0, %s25
    %s42 = sphi 0, %s26
    %s46 = sphi 0, %s46
    %s48 = sphi 0, %s46
    %s49 = sphi 0, %s48
    %s63 = sphi 0, %s49
    %s67 = sphi 0, %s67
    %s69 = sphi 0, %s67
    %s70 = sphi 0, %s69
    %s84 = sphi 0, %s70
    %s88 = sphi 0, %s88
    %s90 = sphi 0, %s88
    %s91 = sphi 0, %s90
    %s105 = sphi 0, %s91
    %s109 = sphi 0, %s109
    %s111 = sphi 0, %s109
    %s112 = sphi 0, %s111
    %s126 = sphi 0, %s112
    %s130 = sphi 0, %s130
    %s132 = sphi 0, %s130
    %s133 = sphi 0, %s132
    %s147 = sphi 0, %s133
    %s153 = sphi 0, %s155
    %s156 = sphi 0, %s153
    %s157 = sphi 0, %s156
    %s173 = sphi 0, %s157
  $region4: #{shallow_fbcsp_encoder_forward.1} parent=0 // loop_header_branch
    %15 = sbr.rel (%p13) target = $region8
  $region5: #{shallow_fbcsp_encoder_forward.1} parent=0 // loop_body
    %s17 = ssub.s32 %s12, 1
    %s18 = ssub.s32 %s12, 2
    %s19 = sadd.s32 %s12, 1
    %s20 = ssub.s32 %s12, %s19
    %p21 = scmp.eq.s32.totalorder %s20, 0
    %s23 = sadd.s32 %s22, 1
    %s24 = scalar_select %p21, %s22, %s23
    %p27 = pneg %p21
    %p28 = scmp.eq.s32.totalorder %s12, 1
    %p29 = por %p27, %p28
    %p30 = scmp.ne.s32.totalorder %s22, %s25
    %p31 = scmp.eq.s32.totalorder %s12, 0
    %p32 = por %p30, %p31
    %p33 = scmp.ne.s32.totalorder %s22, %s25
    %p34 = scmp.eq.s32.totalorder %s17, 1
    %p35 = por %p33, %p34
    %p36 = scmp.ne.s32.totalorder %s25, %s26
    %p37 = scmp.eq.s32.totalorder %s17, 0
    %p38 = por %p36, %p37
    %p39 = scmp.ne.s32.totalorder %s25, %s26
    %p40 = scmp.eq.s32.totalorder %s18, 1
    %p41 = por %p39, %p40
    %p43 = scmp.ne.s32.totalorder %s26, %s42
    %p44 = scmp.eq.s32.totalorder %s18, 0
    %p45 = por %p43, %p44
    %s47 = sadd.s32 %s46, 1
    %p50 = scmp.eq.s32.totalorder %s12, 1
    %p51 = scmp.ne.s32.totalorder %s46, %s48
    %p52 = scmp.eq.s32.totalorder %s12, 0
    %p53 = por %p51, %p52
    %p54 = scmp.ne.s32.totalorder %s46, %s48
    %p55 = scmp.eq.s32.totalorder %s17, 1
    %p56 = por %p54, %p55
    %p57 = scmp.ne.s32.totalorder %s48, %s49
    %p58 = scmp.eq.s32.totalorder %s17, 0
    %p59 = por %p57, %p58
    %p60 = scmp.ne.s32.totalorder %s48, %s49
    %p61 = scmp.eq.s32.totalorder %s18, 1
    %p62 = por %p60, %p61
    %p64 = scmp.ne.s32.totalorder %s49, %s63
    %p65 = scmp.eq.s32.totalorder %s18, 0
    %p66 = por %p64, %p65
    %s68 = sadd.s32 %s67, 1
    %p71 = scmp.eq.s32.totalorder %s12, 1
    %p72 = scmp.ne.s32.totalorder %s67, %s69
    %p73 = scmp.eq.s32.totalorder %s12, 0
    %p74 = por %p72, %p73
    %p75 = scmp.ne.s32.totalorder %s67, %s69
    %p76 = scmp.eq.s32.totalorder %s17, 1
    %p77 = por %p75, %p76
    %p78 = scmp.ne.s32.totalorder %s69, %s70
    %p79 = scmp.eq.s32.totalorder %s17, 0
    %p80 = por %p78, %p79
    %p81 = scmp.ne.s32.totalorder %s69, %s70
    %p82 = scmp.eq.s32.totalorder %s18, 1
    %p83 = por %p81, %p82
    %p85 = scmp.ne.s32.totalorder %s70, %s84
    %p86 = scmp.eq.s32.totalorder %s18, 0
    %p87 = por %p85, %p86
    %s89 = sadd.s32 %s88, 1
    %p92 = scmp.eq.s32.totalorder %s12, 1
    %p93 = scmp.ne.s32.totalorder %s88, %s90
    %p94 = scmp.eq.s32.totalorder %s12, 0
    %p95 = por %p93, %p94
    %p96 = scmp.ne.s32.totalorder %s88, %s90
    %p97 = scmp.eq.s32.totalorder %s17, 1
    %p98 = por %p96, %p97
    %p99 = scmp.ne.s32.totalorder %s90, %s91
    %p100 = scmp.eq.s32.totalorder %s17, 0
    %p101 = por %p99, %p100
    %p102 = scmp.ne.s32.totalorder %s90, %s91
    %p103 = scmp.eq.s32.totalorder %s18, 1
    %p104 = por %p102, %p103
    %p106 = scmp.ne.s32.totalorder %s91, %s105
    %p107 = scmp.eq.s32.totalorder %s18, 0
    %p108 = por %p106, %p107
    %s110 = sadd.s32 %s109, 1
    %p113 = scmp.eq.s32.totalorder %s12, 1
    %p114 = scmp.ne.s32.totalorder %s109, %s111
    %p115 = scmp.eq.s32.totalorder %s12, 0
    %p116 = por %p114, %p115
    %p117 = scmp.ne.s32.totalorder %s109, %s111
    %p118 = scmp.eq.s32.totalorder %s17, 1
    %p119 = por %p117, %p118
    %p120 = scmp.ne.s32.totalorder %s111, %s112
    %p121 = scmp.eq.s32.totalorder %s17, 0
    %p122 = por %p120, %p121
    %p123 = scmp.ne.s32.totalorder %s111, %s112
    %p124 = scmp.eq.s32.totalorder %s18, 1
    %p125 = por %p123, %p124
    %p127 = scmp.ne.s32.totalorder %s112, %s126
    %p128 = scmp.eq.s32.totalorder %s18, 0
    %p129 = por %p127, %p128
    %s131 = sadd.s32 %s130, 1
    %p134 = scmp.eq.s32.totalorder %s12, 1
    %p135 = scmp.ne.s32.totalorder %s130, %s132
    %p136 = scmp.eq.s32.totalorder %s12, 0
    %p137 = por %p135, %p136
    %p138 = scmp.ne.s32.totalorder %s130, %s132
    %p139 = scmp.eq.s32.totalorder %s17, 1
    %p140 = por %p138, %p139
    %p141 = scmp.ne.s32.totalorder %s132, %s133
    %p142 = scmp.eq.s32.totalorder %s17, 0
    %p143 = por %p141, %p142
    %p144 = scmp.ne.s32.totalorder %s132, %s133
    %p145 = scmp.eq.s32.totalorder %s18, 1
    %p146 = por %p144, %p145
    %p148 = scmp.ne.s32.totalorder %s133, %s147
    %p149 = scmp.eq.s32.totalorder %s18, 0
    %p150 = por %p148, %p149
    %s151 = ssub.s32 %s12, %s19
    %p152 = scmp.eq.s32.totalorder %s151, 0
    %s154 = sadd.s32 %s153, 1
    %s155 = scalar_select %p152, %s153, %s154
    %p158 = pneg %p152
    %p159 = scmp.eq.s32.totalorder %s12, 1
    %p160 = por %p158, %p159
    %p161 = scmp.ne.s32.totalorder %s153, %s156
    %p162 = scmp.eq.s32.totalorder %s12, 0
    %p163 = por %p161, %p162
    %p164 = scmp.ne.s32.totalorder %s153, %s156
    %p165 = scmp.eq.s32.totalorder %s17, 1
    %p166 = por %p164, %p165
    %p167 = scmp.ne.s32.totalorder %s156, %s157
    %p168 = scmp.eq.s32.totalorder %s17, 0
    %p169 = por %p167, %p168
    %p170 = scmp.ne.s32.totalorder %s156, %s157
    %p171 = scmp.eq.s32.totalorder %s18, 1
    %p172 = por %p170, %p171
    %p174 = scmp.ne.s32.totalorder %s157, %s173
    %p175 = scmp.eq.s32.totalorder %s18, 0
    %p176 = por %p174, %p175
    %p177 = scmp.le.s32.totalorder 1, %s12
    %p178 = scmp.lt.s32.totalorder %s12, 3
    %p179 = pnand %p177, %p178
    %p180 = pneg %p179
    // Predicated region
    $region9: #{shallow_fbcsp_encoder_forward.1} parent=5 // pred_check
      _
    $region10: #{shallow_fbcsp_encoder_forward.1} parent=5 // pred_check_branch
      %182 = sbr.rel (%p179) target = $region12
    $region11: #{shallow_fbcsp_encoder_forward.1} parent=5 // pred_region
      %s183 = ssub.s32 %s12, 1
      // Predicated region
      $region13: #{shallow_fbcsp_encoder_forward.1} parent=11 // pred_check
        %p184 = pneg %p59
      $region14: #{shallow_fbcsp_encoder_forward.1} parent=11 // pred_check_branch
        %186 = sbr.rel (%p184) target = $region16
      $region15: #{shallow_fbcsp_encoder_forward.1} parent=11 // pred_region
        _
      $region16: #{shallow_fbcsp_encoder_forward.1} parent=11 // pred_fallthru
        _
      // Predicated region
      $region17: #{shallow_fbcsp_encoder_forward.1} parent=11 // pred_check
        %p187 = pneg %p80
      $region18: #{shallow_fbcsp_encoder_forward.1} parent=11 // pred_check_branch
        %189 = sbr.rel (%p187) target = $region20
      $region19: #{shallow_fbcsp_encoder_forward.1} parent=11 // pred_region
        _
      $region20: #{shallow_fbcsp_encoder_forward.1} parent=11 // pred_fallthru
        _
      // Predicated region
      $region21: #{shallow_fbcsp_encoder_forward.1} parent=11 // pred_check
        %p190 = pneg %p101
      $region22: #{shallow_fbcsp_encoder_forward.1} parent=11 // pred_check_branch
        %192 = sbr.rel (%p190) target = $region24
      $region23: #{shallow_fbcsp_encoder_forward.1} parent=11 // pred_region
        _
      $region24: #{shallow_fbcsp_encoder_forward.1} parent=11 // pred_fallthru
        _
      // Predicated region
      $region25: #{shallow_fbcsp_encoder_forward.1} parent=11 // pred_check
        %p193 = pneg %p122
      $region26: #{shallow_fbcsp_encoder_forward.1} parent=11 // pred_check_branch
        %195 = sbr.rel (%p193) target = $region28
      $region27: #{shallow_fbcsp_encoder_forward.1} parent=11 // pred_region
        _
      $region28: #{shallow_fbcsp_encoder_forward.1} parent=11 // pred_fallthru
        _
      // Predicated region
      $region29: #{shallow_fbcsp_encoder_forward.1} parent=11 // pred_check
        %p196 = pneg %p143
      $region30: #{shallow_fbcsp_encoder_forward.1} parent=11 // pred_check_branch
        %198 = sbr.rel (%p196) target = $region32
      $region31: #{shallow_fbcsp_encoder_forward.1} parent=11 // pred_region
        _
      $region32: #{shallow_fbcsp_encoder_forward.1} parent=11 // pred_fallthru
        _
    $region12: #{shallow_fbcsp_encoder_forward.1} parent=5 // pred_fallthru
      _
    %p199 = scmp.lt.s32.totalorder %s12, 2
    // Predicated region
    $region33: #{shallow_fbcsp_encoder_forward.1} parent=5 // pred_check
      %p200 = pneg %p199
    $region34: #{shallow_fbcsp_encoder_forward.1} parent=5 // pred_check_branch
      %202 = sbr.rel (%p200) target = $region36
    $region35: #{shallow_fbcsp_encoder_forward.1} parent=5 // pred_region
      // Predicated region
      $region37: #{shallow_fbcsp_encoder_forward.1} parent=35 // pred_check
        %p203 = pneg %p32
      $region38: #{shallow_fbcsp_encoder_forward.1} parent=35 // pred_check_branch
        %205 = sbr.rel (%p203) target = $region40
      $region39: #{shallow_fbcsp_encoder_forward.1} parent=35 // pred_region
        %p206 = scmp.lt.s32.totalorder %s12, 1
        %s207 = scalar_select %p206, %s12, 1
        %s208 = smul.addr %s207, 2
        %s209 = smul.addr %s208, 8
        %s210 = scalar_lea.vmem %s0, %s209
      $region40: #{shallow_fbcsp_encoder_forward.1} parent=35 // pred_fallthru
        _
    $region36: #{shallow_fbcsp_encoder_forward.1} parent=5 // pred_fallthru
      _
    %p211 = scmp.le.s32.totalorder 1, %s12
    %p212 = scmp.lt.s32.totalorder %s12, 3
    %p213 = pnand %p211, %p212
    %p214 = pneg %p213
    // Predicated region
    $region41: #{shallow_fbcsp_encoder_forward.1} parent=5 // pred_check
      _
    $region42: #{shallow_fbcsp_encoder_forward.1} parent=5 // pred_check_branch
      %216 = sbr.rel (%p213) target = $region44
    $region43: #{shallow_fbcsp_encoder_forward.1} parent=5 // pred_region
      %s217 = ssub.s32 %s12, 1
      %p218 = scmp.lt.s32.totalorder %s17, 1
      %s219 = scalar_select %p218, %s17, 1
      %s220 = smul.addr %s219, 2
      %s221 = smul.addr %s220, 8
      %s222 = scalar_lea.vmem %s0, %s221
      %p223 = pneg %p38
      %p224 = pneg %p35
      %p225 = pneg %p59
      %p226 = pneg %p56
      %p227 = pneg %p80
      %p228 = pneg %p77
      %p229 = pneg %p101
      %p230 = pneg %p98
      %p231 = pneg %p122
      %p232 = pneg %p119
      %p233 = pneg %p143
      %p234 = pneg %p140
      %p235 = pneg %p169
      %p236 = pneg %p166
      %p237 = scmp.lt.s32.totalorder %s17, 1
      %s238 = scalar_select %p237, %s17, 1
      %s239 = smul.addr %s238, 8
      %s240 = scalar_lea.vmem %s6, %s239
      %p241 = scmp.lt.s32.totalorder %s17, 1
      %s242 = scalar_select %p241, %s17, 1
      %s243 = smul.addr %s242, 2
      %s244 = smul.addr %s243, 8
      %s245 = scalar_lea.vmem %s0, %s244
      %p246 = scmp.lt.s32.totalorder %s17, 1
      %s247 = scalar_select %p246, %s17, 1
      %s248 = smul.addr %s247, 8
      %s249 = scalar_lea.vmem %s6, %s248
      %v250 = vld [vmem:[%s1] sm:$0xff]
      %v251 = vld [vmem:[%s1 + $0x8] sm:$0xff]
      %v252 = vld [vmem:[%s1 + $0x10] sm:$0xff]
      %v253 = vld [vmem:[%s1 + $0x18] sm:$0xff]
      %v254 = vld [vmem:[%s1 + $0x20] sm:$0xff]
      %s255 = scalar_lea.vmem %s1, 40
      %v256 = vld [vmem:[%s255] sm:$0xff]
      %v257 = vld [vmem:[%s255 + $0x8] sm:$0xff]
      %v258 = vld [vmem:[%s255 + $0x10] sm:$0xff]
      %v259 = vld [vmem:[%s255 + $0x18] sm:$0xff]
      %v260 = vld [vmem:[%s255 + $0x20] sm:$0xff]
      %s261 = scalar_lea.vmem %s1, 80
      %v262 = vld [vmem:[%s261] sm:$0xff]
      %v263 = vld [vmem:[%s261 + $0x8] sm:$0xff]
      %v264 = vld [vmem:[%s261 + $0x10] sm:$0xff]
      %v265 = vld [vmem:[%s261 + $0x18] sm:$0xff]
      %v266 = vld [vmem:[%s261 + $0x20] sm:$0xff]
      %s267 = scalar_lea.vmem %s1, 120
      %v268 = vld [vmem:[%s267] sm:$0xff]
      %v269 = vld [vmem:[%s267 + $0x8] sm:$0xff]
      %v270 = vld [vmem:[%s267 + $0x10] sm:$0xff]
      %v271 = vld [vmem:[%s267 + $0x18] sm:$0xff]
      %v272 = vld [vmem:[%s267 + $0x20] sm:$0xff]
      %s273 = scalar_lea.vmem %s1, 160
      %v274 = vld [vmem:[%s273] sm:$0xff]
      %v275 = vld [vmem:[%s273 + $0x8] sm:$0xff]
      %v276 = vld [vmem:[%s273 + $0x10] sm:$0xff]
      %v277 = vld [vmem:[%s273 + $0x18] sm:$0xff]
      %v278 = vld [vmem:[%s273 + $0x20] sm:$0xff]
      %v279 = vld [vmem:[%s2] sm:$0xff]
      %v280 = vld [vmem:[%s2 + $0x8] sm:$0xff]
      %v281 = vld [vmem:[%s2 + $0x10] sm:$0xff]
      %v282 = vld [vmem:[%s2 + $0x18] sm:$0xff]
      %v283 = vld [vmem:[%s2 + $0x20] sm:$0xff]
      %v284 = vld [vmem:[%s3] sm:$0xff]
      %v285 = vld [vmem:[%s3 + $0x8] sm:$0xff]
      %v286 = vld [vmem:[%s3 + $0x10] sm:$0xff]
      %v287 = vld [vmem:[%s3 + $0x18] sm:$0xff]
      %v288 = vld [vmem:[%s3 + $0x20] sm:$0xff]
      %v289 = vld [vmem:[%s3 + $0x28] sm:$0xff]
      %v290 = vld [vmem:[%s3 + $0x30] sm:$0xff]
      %v291 = vld [vmem:[%s3 + $0x38] sm:$0xff]
      %v292 = vld [vmem:[%s3 + $0x40] sm:$0xff]
      %v293 = vld [vmem:[%s3 + $0x48] sm:$0xff]
      %v294 = vld [vmem:[%s3 + $0x50] sm:$0xff]
      %v295 = vld [vmem:[%s3 + $0x58] sm:$0xff]
      %v296 = vld [vmem:[%s3 + $0x60] sm:$0xff]
      %v297 = vld [vmem:[%s3 + $0x68] sm:$0xff]
      %v298 = vld [vmem:[%s3 + $0x70] sm:$0xff]
      %v299 = vld [vmem:[%s3 + $0x78] sm:$0xff]
      %v300 = vld [vmem:[%s4] sm:$0xff]
      %v301 = vld [vmem:[%s4 + $0x8] sm:$0xff]
      %v302 = vld [vmem:[%s4 + $0x10] sm:$0xff]
      %v303 = vld [vmem:[%s4 + $0x18] sm:$0xff]
      %v304 = vld [vmem:[%s4 + $0x20] sm:$0xff]
      %v305 = vld [vmem:[%s4 + $0x28] sm:$0xff]
      %v306 = vld [vmem:[%s4 + $0x30] sm:$0xff]
      %v307 = vld [vmem:[%s4 + $0x38] sm:$0xff]
      %v308 = vld [vmem:[%s4 + $0x40] sm:$0xff]
      %v309 = vld [vmem:[%s4 + $0x48] sm:$0xff]
      %v310 = vld [vmem:[%s4 + $0x50] sm:$0xff]
      %v311 = vld [vmem:[%s4 + $0x58] sm:$0xff]
      %v312 = vld [vmem:[%s4 + $0x60] sm:$0xff]
      %v313 = vld [vmem:[%s4 + $0x68] sm:$0xff]
      %v314 = vld [vmem:[%s4 + $0x70] sm:$0xff]
      %v315 = vld [vmem:[%s4 + $0x78] sm:$0xff]
      %v316 = vld [vmem:[%s4 + $0x80] sm:$0xff]
      %v317 = vld [vmem:[%s4 + $0x88] sm:$0xff]
      %v318 = vld [vmem:[%s4 + $0x90] sm:$0xff]
      %v319 = vld [vmem:[%s4 + $0x98] sm:$0xff]
      %v320 = vld [vmem:[%s4 + $0xa0] sm:$0xff]
      %v321 = vld [vmem:[%s4 + $0xa8] sm:$0xff]
      %v322 = vld [vmem:[%s4 + $0xb0] sm:$0xff]
      %v323 = vld [vmem:[%s4 + $0xb8] sm:$0xff]
      %v324 = vld [vmem:[%s4 + $0xc0] sm:$0xff]
      %v325 = vld [vmem:[%s245] sm:$0xff]
      %v326 = vld [vmem:[%s245 + $0x8] sm:$0xff]
      %329 = vrot.lane.b32.xlu0 %v325, 127
      %v330 = vpop.permute.xlu0 %329
      %331 = vrot.lane.b32.xlu0 %v326, 127
      %v332 = vpop.permute.xlu0 %331
      %vm333 = vcmask 1039360
      %v334 = vsel %vm333, %v330, %v332
      %336 = vrot.lane.b32.xlu0 %v325, 126
      %v337 = vpop.permute.xlu0 %336
      %338 = vrot.lane.b32.xlu0 %v326, 126
      %v339 = vpop.permute.xlu0 %338
      %vm340 = vcmask 1031168
      %v341 = vsel %vm340, %v337, %v339
      %343 = vrot.lane.b32.xlu0 %v325, 125
      %v344 = vpop.permute.xlu0 %343
      %345 = vrot.lane.b32.xlu0 %v326, 125
      %v346 = vpop.permute.xlu0 %345
      %vm347 = vcmask 1022976
      %v348 = vsel %vm347, %v344, %v346
      %350 = vrot.lane.b32.xlu0 %v325, 124
      %v351 = vpop.permute.xlu0 %350
      %352 = vrot.lane.b32.xlu0 %v326, 124
      %v353 = vpop.permute.xlu0 %352
      %vm354 = vcmask 1014784
      %v355 = vsel %vm354, %v351, %v353
      %357 = vrot.lane.b32.xlu0 %v325, 123
      %v358 = vpop.permute.xlu0 %357
      %359 = vrot.lane.b32.xlu0 %v326, 123
      %v360 = vpop.permute.xlu0 %359
      %361 = vrot.lane.b32.xlu0 %v334, 123
      %v362 = vpop.permute.xlu0 %361
      %363 = vrot.lane.b32.xlu0 %v332, 123
      %v364 = vpop.permute.xlu0 %363
      %365 = vrot.lane.b32.xlu0 %v341, 123
      %v366 = vpop.permute.xlu0 %365
      %367 = vrot.lane.b32.xlu0 %v339, 123
      %v368 = vpop.permute.xlu0 %367
      %369 = vrot.lane.b32.xlu0 %v348, 123
      %v370 = vpop.permute.xlu0 %369
      %371 = vrot.lane.b32.xlu0 %v346, 123
      %v372 = vpop.permute.xlu0 %371
      %373 = vrot.lane.b32.xlu0 %v355, 123
      %v374 = vpop.permute.xlu0 %373
      %375 = vrot.lane.b32.xlu0 %v353, 123
      %v376 = vpop.permute.xlu0 %375
      %vm377 = vcmask 1006592
      %v378 = vsel %vm377, %v358, %v360
      %v379 = vsel %vm377, %v362, %v364
      %v380 = vsel %vm377, %v366, %v368
      %v381 = vsel %vm377, %v370, %v372
      %v382 = vsel %vm377, %v374, %v376
      %vm388 = vcmask 326656
      %v390 = vsel %vm388, %v256, 0
      %v393 = vsel %vm388, %v257, 0
      %v396 = vsel %vm388, %v258, 0
      %v399 = vsel %vm388, %v259, 0
      %v402 = vsel %vm388, %v260, 0
      %404 = vmatprep.subr.mxu0 0.0
      %405 = vmatpush1.msra.mxu0 %v378
      %406 = vmatprep.subr.mxu0 0.0
      %407 = vmatpush1.msra.mxu0 %v379
      %408 = vmatprep.subr.mxu0 0.0
      %409 = vmatpush1.msra.mxu0 %v380
      %410 = vmatprep.subr.mxu0 0.0
      %411 = vmatpush1.msra.mxu0 %v381
      %412 = vmatprep.subr.mxu0 0.0
      %413 = vmatpush1.msra.mxu0 %v382
      %414 = vmatprep.subr.mxu0 0.0
      %415 = vmatpush1.msra.mxu0 0.0
      %416 = vmatprep.subr.mxu0 0.0
      %417 = vmatpush1.msra.mxu0 0.0
      %418 = vmatprep.subr.mxu0 0.0
      %419 = vmatpush1.msra.mxu0 0.0
      %420 = vmatprep.subr.mxu0 0.0
      %421 = vmatpush1.msra.mxu0 0.0
      %422 = vmatprep.subr.mxu0 0.0
      %423 = vmatpush1.msra.mxu0 0.0
      %424 = vmatprep.subr.mxu0 0.0
      %425 = vmatpush1.msra.mxu0 0.0
      %426 = vmatprep.subr.mxu0 0.0
      %427 = vmatpush1.msra.mxu0 0.0
      %428 = vmatprep.subr.mxu0 0.0
      %429 = vmatpush1.msra.mxu0 0.0
      %430 = vmatprep.subr.mxu0 0.0
      %431 = vmatpush1.msra.mxu0 0.0
      %432 = vmatprep.subr.mxu0 0.0
      %433 = vmatpush1.msra.mxu0 0.0
      %434 = vmatprep.subr.mxu0 0.0
      %435 = vmatpush1.msra.mxu0 0.0
      %436 = vmatprep.subr.mxu0 0.0
      %437 = vmatpush1.msra.mxu0 0.0
      %438 = vmatprep.subr.mxu0 0.0
      %439 = vmatpush1.msra.mxu0 0.0
      %440 = vmatprep.subr.mxu0 0.0
      %441 = vmatpush1.msra.mxu0 0.0
      %442 = vmatprep.subr.mxu0 0.0
      %443 = vmatpush1.msra.mxu0 0.0
      %444 = vmatprep.subr.mxu0 0.0
      %445 = vmatpush1.msra.mxu0 0.0
      %446 = vmatprep.subr.mxu0 0.0
      %447 = vmatpush1.msra.mxu0 0.0
      %448 = vmatprep.subr.mxu0 0.0
      %449 = vmatpush1.msra.mxu0 0.0
      %450 = vmatprep.subr.mxu0 0.0
      %451 = vmatpush1.msra.mxu0 0.0
      %452 = vmatprep.subr.mxu0 0.0
      %453 = vmatpush1.msra.mxu0 0.0
      %454 = vmatprep.subr.mxu0 0.0
      %455 = vmatpush1.msra.mxu0 0.0
      %456 = vmatprep.subr.mxu0 0.0
      %457 = vmatpush1.msra.mxu0 0.0
      %458 = vmatprep.subr.mxu0 0.0
      %459 = vmatpush1.msra.mxu0 0.0
      %460 = vmatprep.subr.mxu0 0.0
      %461 = vmatpush1.msra.mxu0 0.0
      %462 = vmatprep.subr.mxu0 0.0
      %463 = vmatpush1.msra.mxu0 0.0
      %464 = vmatprep.subr.mxu0 0.0
      %465 = vmatpush1.msra.mxu0 0.0
      %466 = vmatprep.subr.mxu0 0.0
      %467 = vmatpush1.msra.mxu0 0.0
      %468 = vmatprep.mubr.f32.mxu0 0.0
      %469 = vmatmul.mubr.f32.gmra.mrb[0].mxu0 %v390
      %v470 = vpop.f32.mrb[0].mxu0
      %v471 = vadd.f32 0.0, %v470
      %v472 = vpop.f32.mrb[0].mxu0
      %473 = vmatprep.mubr.f32.mxu0 0.0
      %474 = vmatmul.mubr.f32.gmra.mrb[0].mxu0 %v393
      %v475 = vpop.f32.mrb[0].mxu0
      %v476 = vadd.f32 0.0, %v475
      %v477 = vpop.f32.mrb[0].mxu0
      %478 = vmatprep.mubr.f32.mxu0 0.0
      %479 = vmatmul.mubr.f32.gmra.mrb[0].mxu0 %v396
      %v480 = vpop.f32.mrb[0].mxu0
      %v481 = vadd.f32 0.0, %v480
      %v482 = vpop.f32.mrb[0].mxu0
      %483 = vmatprep.mubr.f32.mxu0 0.0
      %484 = vmatmul.mubr.f32.gmra.mrb[0].mxu0 %v399
      %v485 = vpop.f32.mrb[0].mxu0
      %v486 = vadd.f32 0.0, %v485
      %v487 = vpop.f32.mrb[0].mxu0
      %488 = vmatprep.mubr.f32.mxu0 0.0
      %489 = vmatmul.mubr.f32.gmra.mrb[0].mxu0 %v402
      %v490 = vpop.f32.mrb[0].mxu0
      %v491 = vadd.f32 0.0, %v490
      %v492 = vpop.f32.mrb[0].mxu0
      %493 = vdwg.mxu0
      %v495 = vsel %vm388, %v250, 0
      %v498 = vsel %vm388, %v251, 0
      %v501 = vsel %vm388, %v252, 0
      %v504 = vsel %vm388, %v253, 0
      %v507 = vsel %vm388, %v254, 0
      %509 = vmatprep.subr.mxu0 0.0
      %510 = vmatpush1.msra.mxu0 %v325
      %511 = vmatprep.subr.mxu0 0.0
      %512 = vmatpush1.msra.mxu0 %v334
      %513 = vmatprep.subr.mxu0 0.0
      %514 = vmatpush1.msra.mxu0 %v341
      %515 = vmatprep.subr.mxu0 0.0
      %516 = vmatpush1.msra.mxu0 %v348
      %517 = vmatprep.subr.mxu0 0.0
      %518 = vmatpush1.msra.mxu0 %v355
      %519 = vmatprep.subr.mxu0 0.0
      %520 = vmatpush1.msra.mxu0 0.0
      %521 = vmatprep.subr.mxu0 0.0
      %522 = vmatpush1.msra.mxu0 0.0
      %523 = vmatprep.subr.mxu0 0.0
      %524 = vmatpush1.msra.mxu0 0.0
      %525 = vmatprep.subr.mxu0 0.0
      %526 = vmatpush1.msra.mxu0 0.0
      %527 = vmatprep.subr.mxu0 0.0
      %528 = vmatpush1.msra.mxu0 0.0
      %529 = vmatprep.subr.mxu0 0.0
      %530 = vmatpush1.msra.mxu0 0.0
      %531 = vmatprep.subr.mxu0 0.0
      %532 = vmatpush1.msra.mxu0 0.0
      %533 = vmatprep.subr.mxu0 0.0
      %534 = vmatpush1.msra.mxu0 0.0
      %535 = vmatprep.subr.mxu0 0.0
      %536 = vmatpush1.msra.mxu0 0.0
      %537 = vmatprep.subr.mxu0 0.0
      %538 = vmatpush1.msra.mxu0 0.0
      %539 = vmatprep.subr.mxu0 0.0
      %540 = vmatpush1.msra.mxu0 0.0
      %541 = vmatprep.subr.mxu0 0.0
      %542 = vmatpush1.msra.mxu0 0.0
      %543 = vmatprep.subr.mxu0 0.0
      %544 = vmatpush1.msra.mxu0 0.0
      %545 = vmatprep.subr.mxu0 0.0
      %546 = vmatpush1.msra.mxu0 0.0
      %547 = vmatprep.subr.mxu0 0.0
      %548 = vmatpush1.msra.mxu0 0.0
      %549 = vmatprep.subr.mxu0 0.0
      %550 = vmatpush1.msra.mxu0 0.0
      %551 = vmatprep.subr.mxu0 0.0
      %552 = vmatpush1.msra.mxu0 0.0
      %553 = vmatprep.subr.mxu0 0.0
      %554 = vmatpush1.msra.mxu0 0.0
      %555 = vmatprep.subr.mxu0 0.0
      %556 = vmatpush1.msra.mxu0 0.0
      %557 = vmatprep.subr.mxu0 0.0
      %558 = vmatpush1.msra.mxu0 0.0
      %559 = vmatprep.subr.mxu0 0.0
      %560 = vmatpush1.msra.mxu0 0.0
      %561 = vmatprep.subr.mxu0 0.0
      %562 = vmatpush1.msra.mxu0 0.0
      %563 = vmatprep.subr.mxu0 0.0
      %564 = vmatpush1.msra.mxu0 0.0
      %565 = vmatprep.subr.mxu0 0.0
      %566 = vmatpush1.msra.mxu0 0.0
      %567 = vmatprep.subr.mxu0 0.0
      %568 = vmatpush1.msra.mxu0 0.0
      %569 = vmatprep.subr.mxu0 0.0
      %570 = vmatpush1.msra.mxu0 0.0
      %571 = vmatprep.subr.mxu0 0.0
      %572 = vmatpush1.msra.mxu0 0.0
      %573 = vmatprep.mubr.f32.mxu0 0.0
      %574 = vmatmul.mubr.f32.gmra.mrb[0].mxu0 %v495
      %v575 = vpop.f32.mrb[0].mxu0
      %v576 = vadd.f32 %v471, %v575
      %v577 = vpop.f32.mrb[0].mxu0
      %578 = vmatprep.mubr.f32.mxu0 0.0
      %579 = vmatmul.mubr.f32.gmra.mrb[0].mxu0 %v498
      %v580 = vpop.f32.mrb[0].mxu0
      %v581 = vadd.f32 %v476, %v580
      %v582 = vpop.f32.mrb[0].mxu0
      %583 = vmatprep.mubr.f32.mxu0 0.0
      %584 = vmatmul.mubr.f32.gmra.mrb[0].mxu0 %v501
      %v585 = vpop.f32.mrb[0].mxu0
      %v586 = vadd.f32 %v481, %v585
      %v587 = vpop.f32.mrb[0].mxu0
      %588 = vmatprep.mubr.f32.mxu0 0.0
      %589 = vmatmul.mubr.f32.gmra.mrb[0].mxu0 %v504
      %v590 = vpop.f32.mrb[0].mxu0
      %v591 = vadd.f32 %v486, %v590
      %v592 = vpop.f32.mrb[0].mxu0
      %593 = vmatprep.mubr.f32.mxu0 0.0
      %594 = vmatmul.mubr.f32.gmra.mrb[0].mxu0 %v507
      %v595 = vpop.f32.mrb[0].mxu0
      %v596 = vadd.f32 %v491, %v595
      %v597 = vpop.f32.mrb[0].mxu0
      %598 = vdwg.mxu0
      %599 = vrot.lane.b32.xlu0 %v325, 118
      %v600 = vpop.permute.xlu0 %599
      %601 = vrot.lane.b32.xlu0 %v326, 118
      %v602 = vpop.permute.xlu0 %601
      %603 = vrot.lane.b32.xlu0 %v334, 118
      %v604 = vpop.permute.xlu0 %603
      %605 = vrot.lane.b32.xlu0 %v332, 118
      %v606 = vpop.permute.xlu0 %605
      %607 = vrot.lane.b32.xlu0 %v341, 118
      %v608 = vpop.permute.xlu0 %607
      %609 = vrot.lane.b32.xlu0 %v339, 118
      %v610 = vpop.permute.xlu0 %609
      %611 = vrot.lane.b32.xlu0 %v348, 118
      %v612 = vpop.permute.xlu0 %611
      %613 = vrot.lane.b32.xlu0 %v346, 118
      %v614 = vpop.permute.xlu0 %613
      %615 = vrot.lane.b32.xlu0 %v355, 118
      %v616 = vpop.permute.xlu0 %615
      %617 = vrot.lane.b32.xlu0 %v353, 118
      %v618 = vpop.permute.xlu0 %617
      %vm619 = vcmask 965632
      %v620 = vsel %vm619, %v600, %v602
      %v621 = vsel %vm619, %v604, %v606
      %v622 = vsel %vm619, %v608, %v610
      %v623 = vsel %vm619, %v612, %v614
      %v624 = vsel %vm619, %v616, %v618
      %v631 = vsel %vm388, %v262, 0
      %v634 = vsel %vm388, %v263, 0
      %v637 = vsel %vm388, %v264, 0
      %v640 = vsel %vm388, %v265, 0
      %v643 = vsel %vm388, %v266, 0
      %645 = vmatprep.subr.mxu0 0.0
      %646 = vmatpush1.msra.mxu0 %v620
      %647 = vmatprep.subr.mxu0 0.0
      %648 = vmatpush1.msra.mxu0 %v621
      %649 = vmatprep.subr.mxu0 0.0
      %650 = vmatpush1.msra.mxu0 %v622
      %651 = vmatprep.subr.mxu0 0.0
      %652 = vmatpush1.msra.mxu0 %v623
      %653 = vmatprep.subr.mxu0 0.0
      %654 = vmatpush1.msra.mxu0 %v624
      %655 = vmatprep.subr.mxu0 0.0
      %656 = vmatpush1.msra.mxu0 0.0
      %657 = vmatprep.subr.mxu0 0.0
      %658 = vmatpush1.msra.mxu0 0.0
      %659 = vmatprep.subr.mxu0 0.0
      %660 = vmatpush1.msra.mxu0 0.0
      %661 = vmatprep.subr.mxu0 0.0
      %662 = vmatpush1.msra.mxu0 0.0
      %663 = vmatprep.subr.mxu0 0.0
      %664 = vmatpush1.msra.mxu0 0.0
      %665 = vmatprep.subr.mxu0 0.0
      %666 = vmatpush1.msra.mxu0 0.0
      %667 = vmatprep.subr.mxu0 0.0
      %668 = vmatpush1.msra.mxu0 0.0
      %669 = vmatprep.subr.mxu0 0.0
      %670 = vmatpush1.msra.mxu0 0.0
      %671 = vmatprep.subr.mxu0 0.0
      %672 = vmatpush1.msra.mxu0 0.0
      %673 = vmatprep.subr.mxu0 0.0
      %674 = vmatpush1.msra.mxu0 0.0
      %675 = vmatprep.subr.mxu0 0.0
      %676 = vmatpush1.msra.mxu0 0.0
      %677 = vmatprep.subr.mxu0 0.0
      %678 = vmatpush1.msra.mxu0 0.0
      %679 = vmatprep.subr.mxu0 0.0
      %680 = vmatpush1.msra.mxu0 0.0
      %681 = vmatprep.subr.mxu0 0.0
      %682 = vmatpush1.msra.mxu0 0.0
      %683 = vmatprep.subr.mxu0 0.0
      %684 = vmatpush1.msra.mxu0 0.0
      %685 = vmatprep.subr.mxu0 0.0
      %686 = vmatpush1.msra.mxu0 0.0
      %687 = vmatprep.subr.mxu0 0.0
      %688 = vmatpush1.msra.mxu0 0.0
      %689 = vmatprep.subr.mxu0 0.0
      %690 = vmatpush1.msra.mxu0 0.0
      %691 = vmatprep.subr.mxu0 0.0
      %692 = vmatpush1.msra.mxu0 0.0
      %693 = vmatprep.subr.mxu0 0.0
      %694 = vmatpush1.msra.mxu0 0.0
      %695 = vmatprep.subr.mxu0 0.0
      %696 = vmatpush1.msra.mxu0 0.0
      %697 = vmatprep.subr.mxu0 0.0
      %698 = vmatpush1.msra.mxu0 0.0
      %699 = vmatprep.subr.mxu0 0.0
      %700 = vmatpush1.msra.mxu0 0.0
      %701 = vmatprep.subr.mxu0 0.0
      %702 = vmatpush1.msra.mxu0 0.0
      %703 = vmatprep.subr.mxu0 0.0
      %704 = vmatpush1.msra.mxu0 0.0
      %705 = vmatprep.subr.mxu0 0.0
      %706 = vmatpush1.msra.mxu0 0.0
      %707 = vmatprep.subr.mxu0 0.0
      %708 = vmatpush1.msra.mxu0 0.0
      %709 = vmatprep.mubr.f32.mxu0 0.0
      %710 = vmatmul.mubr.f32.gmra.mrb[0].mxu0 %v631
      %v711 = vpop.f32.mrb[0].mxu0
      %v712 = vadd.f32 0.0, %v711
      %v713 = vpop.f32.mrb[0].mxu0
      %714 = vmatprep.mubr.f32.mxu0 0.0
      %715 = vmatmul.mubr.f32.gmra.mrb[0].mxu0 %v634
      %v716 = vpop.f32.mrb[0].mxu0
      %v717 = vadd.f32 0.0, %v716
      %v718 = vpop.f32.mrb[0].mxu0
      %719 = vmatprep.mubr.f32.mxu0 0.0
      %720 = vmatmul.mubr.f32.gmra.mrb[0].mxu0 %v637
      %v721 = vpop.f32.mrb[0].mxu0
      %v722 = vadd.f32 0.0, %v721
      %v723 = vpop.f32.mrb[0].mxu0
      %724 = vmatprep.mubr.f32.mxu0 0.0
      %725 = vmatmul.mubr.f32.gmra.mrb[0].mxu0 %v640
      %v726 = vpop.f32.mrb[0].mxu0
      %v727 = vadd.f32 0.0, %v726
      %v728 = vpop.f32.mrb[0].mxu0
      %729 = vmatprep.mubr.f32.mxu0 0.0
      %730 = vmatmul.mubr.f32.gmra.mrb[0].mxu0 %v643
      %v731 = vpop.f32.mrb[0].mxu0
      %v732 = vadd.f32 0.0, %v731
      %v733 = vpop.f32.mrb[0].mxu0
      %734 = vdwg.mxu0
      %v735 = vadd.f32 %v576, %v712
      %v736 = vadd.f32 %v581, %v717
      %v737 = vadd.f32 %v586, %v722
      %v738 = vadd.f32 %v591, %v727
      %v739 = vadd.f32 %v596, %v732
      %740 = vrot.lane.b32.xlu0 %v325, 113
      %v741 = vpop.permute.xlu0 %740
      %742 = vrot.lane.b32.xlu0 %v326, 113
      %v743 = vpop.permute.xlu0 %742
      %744 = vrot.lane.b32.xlu0 %v334, 113
      %v745 = vpop.permute.xlu0 %744
      %746 = vrot.lane.b32.xlu0 %v332, 113
      %v747 = vpop.permute.xlu0 %746
      %748 = vrot.lane.b32.xlu0 %v341, 113
      %v749 = vpop.permute.xlu0 %748
      %750 = vrot.lane.b32.xlu0 %v339, 113
      %v751 = vpop.permute.xlu0 %750
      %752 = vrot.lane.b32.xlu0 %v348, 113
      %v753 = vpop.permute.xlu0 %752
      %754 = vrot.lane.b32.xlu0 %v346, 113
      %v755 = vpop.permute.xlu0 %754
      %756 = vrot.lane.b32.xlu0 %v355, 113
      %v757 = vpop.permute.xlu0 %756
      %758 = vrot.lane.b32.xlu0 %v353, 113
      %v759 = vpop.permute.xlu0 %758
      %vm760 = vcmask 924672
      %v761 = vsel %vm760, %v741, %v743
      %v762 = vsel %vm760, %v745, %v747
      %v763 = vsel %vm760, %v749, %v751
      %v764 = vsel %vm760, %v753, %v755
      %v765 = vsel %vm760, %v757, %v759
      %v772 = vsel %vm388, %v268, 0
      %v775 = vsel %vm388, %v269, 0
      %v778 = vsel %vm388, %v270, 0
      %v781 = vsel %vm388, %v271, 0
      %v784 = vsel %vm388, %v272, 0
      %786 = vmatprep.subr.mxu0 0.0
      %787 = vmatpush1.msra.mxu0 %v761
      %788 = vmatprep.subr.mxu0 0.0
      %789 = vmatpush1.msra.mxu0 %v762
      %790 = vmatprep.subr.mxu0 0.0
      %791 = vmatpush1.msra.mxu0 %v763
      %792 = vmatprep.subr.mxu0 0.0
      %793 = vmatpush1.msra.mxu0 %v764
      %794 = vmatprep.subr.mxu0 0.0
      %795 = vmatpush1.msra.mxu0 %v765
      %796 = vmatprep.subr.mxu0 0.0
      %797 = vmatpush1.msra.mxu0 0.0
      %798 = vmatprep.subr.mxu0 0.0
      %799 = vmatpush1.msra.mxu0 0.0
      %800 = vmatprep.subr.mxu0 0.0
      %801 = vmatpush1.msra.mxu0 0.0
      %802 = vmatprep.subr.mxu0 0.0
      %803 = vmatpush1.msra.mxu0 0.0
      %804 = vmatprep.subr.mxu0 0.0
      %805 = vmatpush1.msra.mxu0 0.0
      %806 = vmatprep.subr.mxu0 0.0
      %807 = vmatpush1.msra.mxu0 0.0
      %808 = vmatprep.subr.mxu0 0.0
      %809 = vmatpush1.msra.mxu0 0.0
      %810 = vmatprep.subr.mxu0 0.0
      %811 = vmatpush1.msra.mxu0 0.0
      %812 = vmatprep.subr.mxu0 0.0
      %813 = vmatpush1.msra.mxu0 0.0
      %814 = vmatprep.subr.mxu0 0.0
      %815 = vmatpush1.msra.mxu0 0.0
      %816 = vmatprep.subr.mxu0 0.0
      %817 = vmatpush1.msra.mxu0 0.0
      %818 = vmatprep.subr.mxu0 0.0
      %819 = vmatpush1.msra.mxu0 0.0
      %820 = vmatprep.subr.mxu0 0.0
      %821 = vmatpush1.msra.mxu0 0.0
      %822 = vmatprep.subr.mxu0 0.0
      %823 = vmatpush1.msra.mxu0 0.0
      %824 = vmatprep.subr.mxu0 0.0
      %825 = vmatpush1.msra.mxu0 0.0
      %826 = vmatprep.subr.mxu0 0.0
      %827 = vmatpush1.msra.mxu0 0.0
      %828 = vmatprep.subr.mxu0 0.0
      %829 = vmatpush1.msra.mxu0 0.0
      %830 = vmatprep.subr.mxu0 0.0
      %831 = vmatpush1.msra.mxu0 0.0
      %832 = vmatprep.subr.mxu0 0.0
      %833 = vmatpush1.msra.mxu0 0.0
      %834 = vmatprep.subr.mxu0 0.0
      %835 = vmatpush1.msra.mxu0 0.0
      %836 = vmatprep.subr.mxu0 0.0
      %837 = vmatpush1.msra.mxu0 0.0
      %838 = vmatprep.subr.mxu0 0.0
      %839 = vmatpush1.msra.mxu0 0.0
      %840 = vmatprep.subr.mxu0 0.0
      %841 = vmatpush1.msra.mxu0 0.0
      %842 = vmatprep.subr.mxu0 0.0
      %843 = vmatpush1.msra.mxu0 0.0
      %844 = vmatprep.subr.mxu0 0.0
      %845 = vmatpush1.msra.mxu0 0.0
      %846 = vmatprep.subr.mxu0 0.0
      %847 = vmatpush1.msra.mxu0 0.0
      %848 = vmatprep.subr.mxu0 0.0
      %849 = vmatpush1.msra.mxu0 0.0
      %850 = vmatprep.mubr.f32.mxu0 0.0
      %851 = vmatmul.mubr.f32.gmra.mrb[0].mxu0 %v772
      %v852 = vpop.f32.mrb[0].mxu0
      %v853 = vadd.f32 0.0, %v852
      %v854 = vpop.f32.mrb[0].mxu0
      %855 = vmatprep.mubr.f32.mxu0 0.0
      %856 = vmatmul.mubr.f32.gmra.mrb[0].mxu0 %v775
      %v857 = vpop.f32.mrb[0].mxu0
      %v858 = vadd.f32 0.0, %v857
      %v859 = vpop.f32.mrb[0].mxu0
      %860 = vmatprep.mubr.f32.mxu0 0.0
      %861 = vmatmul.mubr.f32.gmra.mrb[0].mxu0 %v778
      %v862 = vpop.f32.mrb[0].mxu0
      %v863 = vadd.f32 0.0, %v862
      %v864 = vpop.f32.mrb[0].mxu0
      %865 = vmatprep.mubr.f32.mxu0 0.0
      %866 = vmatmul.mubr.f32.gmra.mrb[0].mxu0 %v781
      %v867 = vpop.f32.mrb[0].mxu0
      %v868 = vadd.f32 0.0, %v867
      %v869 = vpop.f32.mrb[0].mxu0
      %870 = vmatprep.mubr.f32.mxu0 0.0
      %871 = vmatmul.mubr.f32.gmra.mrb[0].mxu0 %v784
      %v872 = vpop.f32.mrb[0].mxu0
      %v873 = vadd.f32 0.0, %v872
      %v874 = vpop.f32.mrb[0].mxu0
      %875 = vdwg.mxu0
      %v876 = vadd.f32 %v735, %v853
      %v877 = vadd.f32 %v736, %v858
      %v878 = vadd.f32 %v737, %v863
      %v879 = vadd.f32 %v738, %v868
      %v880 = vadd.f32 %v739, %v873
      %881 = vrot.lane.b32.xlu0 %v325, 108
      %v882 = vpop.permute.xlu0 %881
      %883 = vrot.lane.b32.xlu0 %v326, 108
      %v884 = vpop.permute.xlu0 %883
      %885 = vrot.lane.b32.xlu0 %v334, 108
      %v886 = vpop.permute.xlu0 %885
      %887 = vrot.lane.b32.xlu0 %v332, 108
      %v888 = vpop.permute.xlu0 %887
      %889 = vrot.lane.b32.xlu0 %v341, 108
      %v890 = vpop.permute.xlu0 %889
      %891 = vrot.lane.b32.xlu0 %v339, 108
      %v892 = vpop.permute.xlu0 %891
      %893 = vrot.lane.b32.xlu0 %v348, 108
      %v894 = vpop.permute.xlu0 %893
      %895 = vrot.lane.b32.xlu0 %v346, 108
      %v896 = vpop.permute.xlu0 %895
      %897 = vrot.lane.b32.xlu0 %v355, 108
      %v898 = vpop.permute.xlu0 %897
      %899 = vrot.lane.b32.xlu0 %v353, 108
      %v900 = vpop.permute.xlu0 %899
      %vm901 = vcmask 883712
      %v902 = vsel %vm901, %v882, %v884
      %v903 = vsel %vm901, %v886, %v888
      %v904 = vsel %vm901, %v890, %v892
      %v905 = vsel %vm901, %v894, %v896
      %v906 = vsel %vm901, %v898, %v900
      %v913 = vsel %vm388, %v274, 0
      %v916 = vsel %vm388, %v275, 0
      %v919 = vsel %vm388, %v276, 0
      %v922 = vsel %vm388, %v277, 0
      %v925 = vsel %vm388, %v278, 0
      %927 = vmatprep.subr.mxu0 0.0
      %928 = vmatpush1.msra.mxu0 %v902
      %929 = vmatprep.subr.mxu0 0.0
      %930 = vmatpush1.msra.mxu0 %v903
      %931 = vmatprep.subr.mxu0 0.0
      %932 = vmatpush1.msra.mxu0 %v904
      %933 = vmatprep.subr.mxu0 0.0
      %934 = vmatpush1.msra.mxu0 %v905
      %935 = vmatprep.subr.mxu0 0.0
      %936 = vmatpush1.msra.mxu0 %v906
      %937 = vmatprep.subr.mxu0 0.0
      %938 = vmatpush1.msra.mxu0 0.0
      %939 = vmatprep.subr.mxu0 0.0
      %940 = vmatpush1.msra.mxu0 0.0
      %941 = vmatprep.subr.mxu0 0.0
      %942 = vmatpush1.msra.mxu0 0.0
      %943 = vmatprep.subr.mxu0 0.0
      %944 = vmatpush1.msra.mxu0 0.0
      %945 = vmatprep.subr.mxu0 0.0
      %946 = vmatpush1.msra.mxu0 0.0
      %947 = vmatprep.subr.mxu0 0.0
      %948 = vmatpush1.msra.mxu0 0.0
      %949 = vmatprep.subr.mxu0 0.0
      %950 = vmatpush1.msra.mxu0 0.0
      %951 = vmatprep.subr.mxu0 0.0
      %952 = vmatpush1.msra.mxu0 0.0
      %953 = vmatprep.subr.mxu0 0.0
      %954 = vmatpush1.msra.mxu0 0.0
      %955 = vmatprep.subr.mxu0 0.0
      %956 = vmatpush1.msra.mxu0 0.0
      %957 = vmatprep.subr.mxu0 0.0
      %958 = vmatpush1.msra.mxu0 0.0
      %959 = vmatprep.subr.mxu0 0.0
      %960 = vmatpush1.msra.mxu0 0.0
      %961 = vmatprep.subr.mxu0 0.0
      %962 = vmatpush1.msra.mxu0 0.0
      %963 = vmatprep.subr.mxu0 0.0
      %964 = vmatpush1.msra.mxu0 0.0
      %965 = vmatprep.subr.mxu0 0.0
      %966 = vmatpush1.msra.mxu0 0.0
      %967 = vmatprep.subr.mxu0 0.0
      %968 = vmatpush1.msra.mxu0 0.0
      %969 = vmatprep.subr.mxu0 0.0
      %970 = vmatpush1.msra.mxu0 0.0
      %971 = vmatprep.subr.mxu0 0.0
      %972 = vmatpush1.msra.mxu0 0.0
      %973 = vmatprep.subr.mxu0 0.0
      %974 = vmatpush1.msra.mxu0 0.0
      %975 = vmatprep.subr.mxu0 0.0
      %976 = vmatpush1.msra.mxu0 0.0
      %977 = vmatprep.subr.mxu0 0.0
      %978 = vmatpush1.msra.mxu0 0.0
      %979 = vmatprep.subr.mxu0 0.0
      %980 = vmatpush1.msra.mxu0 0.0
      %981 = vmatprep.subr.mxu0 0.0
      %982 = vmatpush1.msra.mxu0 0.0
      %983 = vmatprep.subr.mxu0 0.0
      %984 = vmatpush1.msra.mxu0 0.0
      %985 = vmatprep.subr.mxu0 0.0
      %986 = vmatpush1.msra.mxu0 0.0
      %987 = vmatprep.subr.mxu0 0.0
      %988 = vmatpush1.msra.mxu0 0.0
      %989 = vmatprep.subr.mxu0 0.0
      %990 = vmatpush1.msra.mxu0 0.0
      %991 = vmatprep.mubr.f32.mxu0 0.0
      %992 = vmatmul.mubr.f32.gmra.mrb[0].mxu0 %v913
      %v993 = vpop.f32.mrb[0].mxu0
      %v994 = vadd.f32 0.0, %v993
      %v995 = vpop.f32.mrb[0].mxu0
      %996 = vmatprep.mubr.f32.mxu0 0.0
      %997 = vmatmul.mubr.f32.gmra.mrb[0].mxu0 %v916
      %v998 = vpop.f32.mrb[0].mxu0
      %v999 = vadd.f32 0.0, %v998
      %v1000 = vpop.f32.mrb[0].mxu0
      %1001 = vmatprep.mubr.f32.mxu0 0.0
      %1002 = vmatmul.mubr.f32.gmra.mrb[0].mxu0 %v919
      %v1003 = vpop.f32.mrb[0].mxu0
      %v1004 = vadd.f32 0.0, %v1003
      %v1005 = vpop.f32.mrb[0].mxu0
      %1006 = vmatprep.mubr.f32.mxu0 0.0
      %1007 = vmatmul.mubr.f32.gmra.mrb[0].mxu0 %v922
      %v1008 = vpop.f32.mrb[0].mxu0
      %v1009 = vadd.f32 0.0, %v1008
      %v1010 = vpop.f32.mrb[0].mxu0
      %1011 = vmatprep.mubr.f32.mxu0 0.0
      %1012 = vmatmul.mubr.f32.gmra.mrb[0].mxu0 %v925
      %v1013 = vpop.f32.mrb[0].mxu0
      %v1014 = vadd.f32 0.0, %v1013
      %v1015 = vpop.f32.mrb[0].mxu0
      %1016 = vdwg.mxu0
      %v1017 = vadd.f32 %v876, %v994
      %v1018 = vadd.f32 %v877, %v999
      %v1019 = vadd.f32 %v878, %v1004
      %v1020 = vadd.f32 %v879, %v1009
      %v1021 = vadd.f32 %v880, %v1014
      %1023 = vset.pattern.permute.xlu0 0
      %1024 = vperm.xlu0 %1023, %v279
      %v1025 = vpop.permute.xlu0 %1024
      %1028 = vset.pattern.permute.xlu0 0
      %1029 = vperm.xlu0 %1028, %v280
      %v1030 = vpop.permute.xlu0 %1029
      %1033 = vset.pattern.permute.xlu0 0
      %1034 = vperm.xlu0 %1033, %v281
      %v1035 = vpop.permute.xlu0 %1034
      %1038 = vset.pattern.permute.xlu0 0
      %1039 = vperm.xlu0 %1038, %v282
      %v1040 = vpop.permute.xlu0 %1039
      %1043 = vset.pattern.permute.xlu0 0
      %1044 = vperm.xlu0 %1043, %v283
      %v1045 = vpop.permute.xlu0 %1044
      %v1047 = vadd.f32 %v1017, %v1025
      %v1048 = vadd.f32 %v1018, %v1030
      %v1049 = vadd.f32 %v1019, %v1035
      %v1050 = vadd.f32 %v1020, %v1040
      %v1051 = vadd.f32 %v1021, %v1045
      %v1052 = vmul.f32 %v1047, %v1047
      %v1053 = vmul.f32 %v1048, %v1048
      %v1054 = vmul.f32 %v1049, %v1049
      %v1055 = vmul.f32 %v1050, %v1050
      %v1056 = vmul.f32 %v1051, %v1051
      %1057 = vmatprep.subr.mxu0 0.0
      %1058 = vmatpush1.msra.mxu0 %v284
      %1059 = vmatprep.subr.mxu0 0.0
      %1060 = vmatpush1.msra.mxu0 %v285
      %1061 = vmatprep.subr.mxu0 0.0
      %1062 = vmatpush1.msra.mxu0 %v286
      %1063 = vmatprep.subr.mxu0 0.0
      %1064 = vmatpush1.msra.mxu0 %v287
      %1065 = vmatprep.subr.mxu0 0.0
      %1066 = vmatpush1.msra.mxu0 %v288
      %1067 = vmatprep.subr.mxu0 0.0
      %1068 = vmatpush1.msra.mxu0 %v289
      %1069 = vmatprep.subr.mxu0 0.0
      %1070 = vmatpush1.msra.mxu0 %v290
      %1071 = vmatprep.subr.mxu0 0.0
      %1072 = vmatpush1.msra.mxu0 %v291
      %1073 = vmatprep.subr.mxu0 0.0
      %1074 = vmatpush1.msra.mxu0 %v292
      %1075 = vmatprep.subr.mxu0 0.0
      %1076 = vmatpush1.msra.mxu0 %v293
      %1077 = vmatprep.subr.mxu0 0.0
      %1078 = vmatpush1.msra.mxu0 %v294
      %1079 = vmatprep.subr.mxu0 0.0
      %1080 = vmatpush1.msra.mxu0 %v295
      %1081 = vmatprep.subr.mxu0 0.0
      %1082 = vmatpush1.msra.mxu0 %v296
      %1083 = vmatprep.subr.mxu0 0.0
      %1084 = vmatpush1.msra.mxu0 %v297
      %1085 = vmatprep.subr.mxu0 0.0
      %1086 = vmatpush1.msra.mxu0 %v298
      %1087 = vmatprep.subr.mxu0 0.0
      %1088 = vmatpush1.msra.mxu0 %v299
      %1089 = vmatprep.subr.mxu0 0.0
      %1090 = vmatpush1.msra.mxu0 0.0
      %1091 = vmatprep.subr.mxu0 0.0
      %1092 = vmatpush1.msra.mxu0 0.0
      %1093 = vmatprep.subr.mxu0 0.0
      %1094 = vmatpush1.msra.mxu0 0.0
      %1095 = vmatprep.subr.mxu0 0.0
      %1096 = vmatpush1.msra.mxu0 0.0
      %1097 = vmatprep.subr.mxu0 0.0
      %1098 = vmatpush1.msra.mxu0 0.0
      %1099 = vmatprep.subr.mxu0 0.0
      %1100 = vmatpush1.msra.mxu0 0.0
      %1101 = vmatprep.subr.mxu0 0.0
      %1102 = vmatpush1.msra.mxu0 0.0
      %1103 = vmatprep.subr.mxu0 0.0
      %1104 = vmatpush1.msra.mxu0 0.0
      %1105 = vmatprep.subr.mxu0 0.0
      %1106 = vmatpush1.msra.mxu0 0.0
      %1107 = vmatprep.subr.mxu0 0.0
      %1108 = vmatpush1.msra.mxu0 0.0
      %1109 = vmatprep.subr.mxu0 0.0
      %1110 = vmatpush1.msra.mxu0 0.0
      %1111 = vmatprep.subr.mxu0 0.0
      %1112 = vmatpush1.msra.mxu0 0.0
      %1113 = vmatprep.subr.mxu0 0.0
      %1114 = vmatpush1.msra.mxu0 0.0
      %1115 = vmatprep.subr.mxu0 0.0
      %1116 = vmatpush1.msra.mxu0 0.0
      %1117 = vmatprep.subr.mxu0 0.0
      %1118 = vmatpush1.msra.mxu0 0.0
      %1119 = vmatprep.subr.mxu0 0.0
      %1120 = vmatpush1.msra.mxu0 0.0
      %1121 = vmatprep.mubr.f32.mxu0 0.0
      %1122 = vmatmul.mubr.f32.gmra.mrb[0].mxu0 %v1052
      %v1123 = vpop.f32.mrb[0].mxu0
      %v1124 = vadd.f32 0.0, %v1123
      %v1125 = vpop.f32.mrb[0].mxu0
      %1126 = vmatprep.mubr.f32.mxu0 0.0
      %1127 = vmatmul.mubr.f32.gmra.mrb[0].mxu0 %v1053
      %v1128 = vpop.f32.mrb[0].mxu0
      %v1129 = vadd.f32 0.0, %v1128
      %v1130 = vpop.f32.mrb[0].mxu0
      %1131 = vmatprep.mubr.f32.mxu0 0.0
      %1132 = vmatmul.mubr.f32.gmra.mrb[0].mxu0 %v1054
      %v1133 = vpop.f32.mrb[0].mxu0
      %v1134 = vadd.f32 0.0, %v1133
      %v1135 = vpop.f32.mrb[0].mxu0
      %1136 = vmatprep.mubr.f32.mxu0 0.0
      %1137 = vmatmul.mubr.f32.gmra.mrb[0].mxu0 %v1055
      %v1138 = vpop.f32.mrb[0].mxu0
      %v1139 = vadd.f32 0.0, %v1138
      %v1140 = vpop.f32.mrb[0].mxu0
      %1141 = vmatprep.mubr.f32.mxu0 0.0
      %1142 = vmatmul.mubr.f32.gmra.mrb[0].mxu0 %v1056
      %v1143 = vpop.f32.mrb[0].mxu0
      %v1144 = vadd.f32 0.0, %v1143
      %v1145 = vpop.f32.mrb[0].mxu0
      %1146 = vdwg.mxu0
      %v1147 = vmax.f32 %v1124, 1e-06
      %v1148 = vmax.f32 %v1129, 1e-06
      %v1149 = vmax.f32 %v1134, 1e-06
      %v1150 = vmax.f32 %v1139, 1e-06
      %v1151 = vmax.f32 %v1144, 1e-06
      %v1152 = vlog2.pop %v1147
      %v1153 = vmul.f32 %v1152, 0.6931472
      %v1154 = vlog2.pop %v1148
      %v1155 = vmul.f32 %v1154, 0.6931472
      %v1156 = vlog2.pop %v1149
      %v1157 = vmul.f32 %v1156, 0.6931472
      %v1158 = vlog2.pop %v1150
      %v1159 = vmul.f32 %v1158, 0.6931472
      %v1160 = vlog2.pop %v1151
      %v1161 = vmul.f32 %v1160, 0.6931472
      %v1162 = vmul.f32 %v300, %v1153
      %v1163 = vmul.f32 %v301, %v1155
      %v1164 = vmul.f32 %v302, %v1157
      %v1165 = vmul.f32 %v303, %v1159
      %v1166 = vmul.f32 %v304, %v1161
      %v1167 = vmul.f32 %v305, %v1153
      %v1168 = vmul.f32 %v306, %v1155
      %v1169 = vmul.f32 %v307, %v1157
      %v1170 = vmul.f32 %v308, %v1159
      %v1171 = vmul.f32 %v309, %v1161
      %v1172 = vmul.f32 %v310, %v1153
      %v1173 = vmul.f32 %v311, %v1155
      %v1174 = vmul.f32 %v312, %v1157
      %v1175 = vmul.f32 %v313, %v1159
      %v1176 = vmul.f32 %v314, %v1161
      %v1177 = vmul.f32 %v315, %v1153
      %v1178 = vmul.f32 %v316, %v1155
      %v1179 = vmul.f32 %v317, %v1157
      %v1180 = vmul.f32 %v318, %v1159
      %v1181 = vmul.f32 %v319, %v1161
      %v1182 = vmul.f32 %v320, %v1153
      %v1183 = vmul.f32 %v321, %v1155
      %v1184 = vmul.f32 %v322, %v1157
      %v1185 = vmul.f32 %v323, %v1159
      %v1186 = vmul.f32 %v324, %v1161
      %1187 = vadd.xlane.f32.xlu0 %v1162
      %v1188 = vpop.xlane.xlu0 %1187
      %1189 = vadd.xlane.f32.xlu0 %v1163
      %v1190 = vpop.xlane.xlu0 %1189
      %1191 = vadd.xlane.f32.xlu0 %v1164
      %v1192 = vpop.xlane.xlu0 %1191
      %1193 = vadd.xlane.f32.xlu0 %v1165
      %v1194 = vpop.xlane.xlu0 %1193
      %1195 = vadd.xlane.f32.xlu0 %v1166
      %v1196 = vpop.xlane.xlu0 %1195
      %1197 = vadd.xlane.f32.xlu0 %v1167
      %v1198 = vpop.xlane.xlu0 %1197
      %1199 = vadd.xlane.f32.xlu0 %v1168
      %v1200 = vpop.xlane.xlu0 %1199
      %1201 = vadd.xlane.f32.xlu0 %v1169
      %v1202 = vpop.xlane.xlu0 %1201
      %1203 = vadd.xlane.f32.xlu0 %v1170
      %v1204 = vpop.xlane.xlu0 %1203
      %1205 = vadd.xlane.f32.xlu0 %v1171
      %v1206 = vpop.xlane.xlu0 %1205
      %1207 = vadd.xlane.f32.xlu0 %v1172
      %v1208 = vpop.xlane.xlu0 %1207
      %1209 = vadd.xlane.f32.xlu0 %v1173
      %v1210 = vpop.xlane.xlu0 %1209
      %1211 = vadd.xlane.f32.xlu0 %v1174
      %v1212 = vpop.xlane.xlu0 %1211
      %1213 = vadd.xlane.f32.xlu0 %v1175
      %v1214 = vpop.xlane.xlu0 %1213
      %1215 = vadd.xlane.f32.xlu0 %v1176
      %v1216 = vpop.xlane.xlu0 %1215
      %1217 = vadd.xlane.f32.xlu0 %v1177
      %v1218 = vpop.xlane.xlu0 %1217
      %1219 = vadd.xlane.f32.xlu0 %v1178
      %v1220 = vpop.xlane.xlu0 %1219
      %1221 = vadd.xlane.f32.xlu0 %v1179
      %v1222 = vpop.xlane.xlu0 %1221
      %1223 = vadd.xlane.f32.xlu0 %v1180
      %v1224 = vpop.xlane.xlu0 %1223
      %1225 = vadd.xlane.f32.xlu0 %v1181
      %v1226 = vpop.xlane.xlu0 %1225
      %1227 = vadd.xlane.f32.xlu0 %v1182
      %v1228 = vpop.xlane.xlu0 %1227
      %1229 = vadd.xlane.f32.xlu0 %v1183
      %v1230 = vpop.xlane.xlu0 %1229
      %1231 = vadd.xlane.f32.xlu0 %v1184
      %v1232 = vpop.xlane.xlu0 %1231
      %1233 = vadd.xlane.f32.xlu0 %v1185
      %v1234 = vpop.xlane.xlu0 %1233
      %1235 = vadd.xlane.f32.xlu0 %v1186
      %v1236 = vpop.xlane.xlu0 %1235
      %v1262 = vlaneseq
      %v1263 = vand.u32 %v1262, 127
      %v1264 = vlaneseq
      %v1265 = vshrl.u32 %v1264, 7
      %v1266 = vsub.s32 %v1263, %v1265
      %v1267 = vrot.slane %v1188, %v1266
      %v1268 = vadd.s32 %v1263, 4294967288
      %v1269 = vlaneseq
      %v1270 = vshrl.u32 %v1269, 7
      %v1271 = vsub.s32 %v1268, %v1270
      %v1272 = vrot.slane %v1190, %v1271
      %vm1273 = vcmask 130112
      %v1274 = vsel %vm1273, %v1272, %v1267
      %v1275 = vadd.s32 %v1263, 4294967280
      %v1276 = vlaneseq
      %v1277 = vshrl.u32 %v1276, 7
      %v1278 = vsub.s32 %v1275, %v1277
      %v1279 = vrot.slane %v1192, %v1278
      %vm1280 = vcmask 195712
      %v1281 = vsel %vm1280, %v1279, %v1274
      %v1282 = vadd.s32 %v1263, 4294967272
      %v1283 = vlaneseq
      %v1284 = vshrl.u32 %v1283, 7
      %v1285 = vsub.s32 %v1282, %v1284
      %v1286 = vrot.slane %v1194, %v1285
      %vm1287 = vcmask 261312
      %v1288 = vsel %vm1287, %v1286, %v1281
      %v1289 = vadd.s32 %v1263, 4294967264
      %v1290 = vlaneseq
      %v1291 = vshrl.u32 %v1290, 7
      %v1292 = vsub.s32 %v1289, %v1291
      %v1293 = vrot.slane %v1196, %v1292
      %vm1294 = vcmask 326912
      %v1295 = vsel %vm1294, %v1293, %v1288
      %v1296 = vlaneseq
      %v1297 = vshrl.u32 %v1296, 7
      %v1298 = vsub.s32 %v1263, %v1297
      %v1299 = vrot.slane %v1198, %v1298
      %v1300 = vlaneseq
      %v1301 = vshrl.u32 %v1300, 7
      %v1302 = vsub.s32 %v1268, %v1301
      %v1303 = vrot.slane %v1200, %v1302
      %v1304 = vsel %vm1273, %v1303, %v1299
      %v1305 = vlaneseq
      %v1306 = vshrl.u32 %v1305, 7
      %v1307 = vsub.s32 %v1275, %v1306
      %v1308 = vrot.slane %v1202, %v1307
      %v1309 = vsel %vm1280, %v1308, %v1304
      %v1310 = vlaneseq
      %v1311 = vshrl.u32 %v1310, 7
      %v1312 = vsub.s32 %v1282, %v1311
      %v1313 = vrot.slane %v1204, %v1312
      %v1314 = vsel %vm1287, %v1313, %v1309
      %v1315 = vlaneseq
      %v1316 = vshrl.u32 %v1315, 7
      %v1317 = vsub.s32 %v1289, %v1316
      %v1318 = vrot.slane %v1206, %v1317
      %v1319 = vsel %vm1294, %v1318, %v1314
      %v1320 = vlaneseq
      %v1321 = vshrl.u32 %v1320, 7
      %v1322 = vsub.s32 %v1263, %v1321
      %v1323 = vrot.slane %v1208, %v1322
      %v1324 = vlaneseq
      %v1325 = vshrl.u32 %v1324, 7
      %v1326 = vsub.s32 %v1268, %v1325
      %v1327 = vrot.slane %v1210, %v1326
      %v1328 = vsel %vm1273, %v1327, %v1323
      %v1329 = vlaneseq
      %v1330 = vshrl.u32 %v1329, 7
      %v1331 = vsub.s32 %v1275, %v1330
      %v1332 = vrot.slane %v1212, %v1331
      %v1333 = vsel %vm1280, %v1332, %v1328
      %v1334 = vlaneseq
      %v1335 = vshrl.u32 %v1334, 7
      %v1336 = vsub.s32 %v1282, %v1335
      %v1337 = vrot.slane %v1214, %v1336
      %v1338 = vsel %vm1287, %v1337, %v1333
      %v1339 = vlaneseq
      %v1340 = vshrl.u32 %v1339, 7
      %v1341 = vsub.s32 %v1289, %v1340
      %v1342 = vrot.slane %v1216, %v1341
      %v1343 = vsel %vm1294, %v1342, %v1338
      %v1344 = vlaneseq
      %v1345 = vshrl.u32 %v1344, 7
      %v1346 = vsub.s32 %v1263, %v1345
      %v1347 = vrot.slane %v1218, %v1346
      %v1348 = vlaneseq
      %v1349 = vshrl.u32 %v1348, 7
      %v1350 = vsub.s32 %v1268, %v1349
      %v1351 = vrot.slane %v1220, %v1350
      %v1352 = vsel %vm1273, %v1351, %v1347
      %v1353 = vlaneseq
      %v1354 = vshrl.u32 %v1353, 7
      %v1355 = vsub.s32 %v1275, %v1354
      %v1356 = vrot.slane %v1222, %v1355
      %v1357 = vsel %vm1280, %v1356, %v1352
      %v1358 = vlaneseq
      %v1359 = vshrl.u32 %v1358, 7
      %v1360 = vsub.s32 %v1282, %v1359
      %v1361 = vrot.slane %v1224, %v1360
      %v1362 = vsel %vm1287, %v1361, %v1357
      %v1363 = vlaneseq
      %v1364 = vshrl.u32 %v1363, 7
      %v1365 = vsub.s32 %v1289, %v1364
      %v1366 = vrot.slane %v1226, %v1365
      %v1367 = vsel %vm1294, %v1366, %v1362
      %v1368 = vlaneseq
      %v1369 = vshrl.u32 %v1368, 7
      %v1370 = vsub.s32 %v1263, %v1369
      %v1371 = vrot.slane %v1228, %v1370
      %v1372 = vlaneseq
      %v1373 = vshrl.u32 %v1372, 7
      %v1374 = vsub.s32 %v1268, %v1373
      %v1375 = vrot.slane %v1230, %v1374
      %v1376 = vsel %vm1273, %v1375, %v1371
      %v1377 = vlaneseq
      %v1378 = vshrl.u32 %v1377, 7
      %v1379 = vsub.s32 %v1275, %v1378
      %v1380 = vrot.slane %v1232, %v1379
      %v1381 = vsel %vm1280, %v1380, %v1376
      %v1382 = vlaneseq
      %v1383 = vshrl.u32 %v1382, 7
      %v1384 = vsub.s32 %v1282, %v1383
      %v1385 = vrot.slane %v1234, %v1384
      %v1386 = vsel %vm1287, %v1385, %v1381
      %v1387 = vlaneseq
      %v1388 = vshrl.u32 %v1387, 7
      %v1389 = vsub.s32 %v1289, %v1388
      %v1390 = vrot.slane %v1236, %v1389
      %v1391 = vsel %vm1294, %v1390, %v1386
      %vm1392 = vcmask 1041409
      %v1393 = vsel %vm1392, %v1319, %v1295
      %vm1394 = vcmask 1042434
      %v1395 = vsel %vm1394, %v1343, %v1393
      %vm1396 = vcmask 1043459
      %v1397 = vsel %vm1396, %v1367, %v1395
      %vm1398 = vcmask 1044484
      %v1399 = vsel %vm1398, %v1391, %v1397
      %vm1401 = vcmask 323584
      %v1402 = vsel %vm1401, %v1399, 0.0
      %1403 = vadd.xlane.f32.xlu0 %v1402
      %v1404 = vpop.xlane.xlu0 %1403
      %v1405 = vld [vmem:[%s5] sm:$0x1f]
      %v1406 = vadd.f32 %v1404, %v1405
      %vm1407 = vcmask 4096
      %v1408 = vsel %vm1407, %v1406, -inf
      %v1409 = vrot.slane %v1408, 4
      %v1410 = vmax.f32 %v1408, %v1409
      %v1411 = vrot.slane %v1410, 2
      %v1412 = vmax.f32 %v1410, %v1411
      %v1413 = vrot.slane %v1412, 1
      %v1414 = vmax.f32 %v1412, %v1413
      %v1415 = vsub.f32 %v1406, %v1414
      %v1416 = vmul.f32 %v1415, 1.442695
      %v1417 = vpow.pop %v1416
      %v1418 = vsel %vm1407, %v1417, 0.0
      %v1419 = vrot.slane %v1418, 4
      %v1420 = vadd.f32 %v1418, %v1419
      %v1421 = vrot.slane %v1420, 2
      %v1422 = vadd.f32 %v1420, %v1421
      %v1423 = vrot.slane %v1422, 1
      %v1424 = vadd.f32 %v1422, %v1423
      %v1425 = vlog2.pop %v1424
      %v1426 = vmul.f32 %v1425, 0.6931472
      %v1427 = vsub.f32 %v1415, %v1426
      %1428 = vst.msk [vmem:[%s249] sm:$0x1f] %vm1407, %v1427
      %p1429 = scmp.lt.s32.totalorder %s17, 1
      %s1430 = scalar_select %p1429, %s17, 1
      %s1431 = smul.addr %s1430, 8
      %s1432 = scalar_lea.vmem %s6, %s1431
      // Predicated region
      $region45: #{shallow_fbcsp_encoder_forward.1} parent=43 // pred_check
        %p1433 = pneg %p166
      $region46: #{shallow_fbcsp_encoder_forward.1} parent=43 // pred_check_branch
        %1435 = sbr.rel (%p1433) target = $region48
      $region47: #{shallow_fbcsp_encoder_forward.1} parent=43 // pred_region
        _
      $region48: #{shallow_fbcsp_encoder_forward.1} parent=43 // pred_fallthru
        _
    $region44: #{shallow_fbcsp_encoder_forward.1} parent=5 // pred_fallthru
      _
    %p1436 = scmp.le.s32.totalorder 2, %s12
    // Predicated region
    $region49: #{shallow_fbcsp_encoder_forward.1} parent=5 // pred_check
      %p1437 = pneg %p1436
    $region50: #{shallow_fbcsp_encoder_forward.1} parent=5 // pred_check_branch
      %1439 = sbr.rel (%p1437) target = $region52
    $region51: #{shallow_fbcsp_encoder_forward.1} parent=5 // pred_region
      %s1440 = ssub.s32 %s12, 2
      // Predicated region
      $region53: #{shallow_fbcsp_encoder_forward.1} parent=51 // pred_check
        %p1441 = pneg %p172
      $region54: #{shallow_fbcsp_encoder_forward.1} parent=51 // pred_check_branch
        %1443 = sbr.rel (%p1441) target = $region56
      $region55: #{shallow_fbcsp_encoder_forward.1} parent=51 // pred_region
        %p1444 = scmp.lt.s32.totalorder %s18, 1
        %s1445 = scalar_select %p1444, %s18, 1
        %s1446 = smul.addr %s1445, 8
        %s1447 = scalar_lea.vmem %s6, %s1446
      $region56: #{shallow_fbcsp_encoder_forward.1} parent=51 // pred_fallthru
        _
    $region52: #{shallow_fbcsp_encoder_forward.1} parent=5 // pred_fallthru
      _
  $region6: #{shallow_fbcsp_encoder_forward.1} parent=0 // loop_footer
    %s16 = sadd.s32 1, %s12
  $region7: #{shallow_fbcsp_encoder_forward.1} parent=0 // loop_footer_branch
    %11 = sbr.rel target = $region3
  $region8: #{shallow_fbcsp_encoder_forward.1} parent=0 // loop_exit
    _

</llo_original>
